<compile_context>
chip_gen: v5e
topology: v5e:2x2
jax: 0.10.0
libtpu: 0.0.40
codegen_flags: <defaults>
</compile_context>

<pallas_src>
import functools

import numpy as np
import jax
import jax.numpy as jnp
from jax.experimental import pallas as pl
from jax.experimental.pallas import tpu as pltpu

jax.config.update("jax_default_matmul_precision", "highest")


# ---------------------------------------------------------------------------
# Kernel 1: 3x3 conv (im2col, single wide-K matmul) + folded bias/BN + PReLU.
#           NHWC, grid over the (concatenated left|right) batch.
# ---------------------------------------------------------------------------
def _conv3x3_bn_prelu_kernel(xpad_ref, w_ref, scale_ref, shift_ref, o_ref,
                             *, H, W, Cin, Cout, alpha):
    x = xpad_ref[0]                                       # (H+2, W+2, Cin)
    cols = []
    for dy in range(3):                                   # build (H*W, 9*Cin) once
        for dx in range(3):
            cols.append(x[dy:dy + H, dx:dx + W, :].reshape(H * W, Cin))
    patch = jnp.concatenate(cols, axis=-1)                # lane-dim concat
    y = jnp.dot(patch, w_ref[...], preferred_element_type=jnp.float32)
    y = y * scale_ref[...] + shift_ref[...]               # conv bias + BN (eval) folded
    y = jnp.where(y >= 0.0, y, alpha * y)                 # PReLU
    o_ref[0] = y.reshape(H, W, Cout)


def _conv3x3_bn_prelu_res_kernel(xpad_ref, res_ref, w_ref, scale_ref, shift_ref,
                                 y_ref, o_ref, *, H, W, Cin, Cout, alpha):
    x = xpad_ref[0]                                       # (H+2, W+2, Cin)
    cols = []
    for dy in range(3):
        for dx in range(3):
            cols.append(x[dy:dy + H, dx:dx + W, :].reshape(H * W, Cin))
    patch = jnp.concatenate(cols, axis=-1)                # (H*W, 9*Cin)
    y = jnp.dot(patch, w_ref[...], preferred_element_type=jnp.float32)
    y = y * scale_ref[...] + shift_ref[...]
    y = jnp.where(y >= 0.0, y, alpha * y).reshape(H, W, Cout)
    y_ref[0] = y                                          # head output (feeds bq/bs)
    o_ref[0] = res_ref[0] + y                             # fused residual add


def conv3x3_bn_prelu(x_nhwc, w_flat, scale, shift, alpha):
    B, H, W, Cin = x_nhwc.shape
    Cout = w_flat.shape[-1]
    xpad = jnp.pad(x_nhwc, ((0, 0), (1, 1), (1, 1), (0, 0)))
    kernel = functools.partial(_conv3x3_bn_prelu_kernel,
                               H=H, W=W, Cin=Cin, Cout=Cout, alpha=alpha)
    return pl.pallas_call(
        kernel,
        out_shape=jax.ShapeDtypeStruct((B, H, W, Cout), jnp.float32),
        grid=(B,),
        in_specs=[
            pl.BlockSpec((1, H + 2, W + 2, Cin), lambda i: (i, 0, 0, 0)),
            pl.BlockSpec((9 * Cin, Cout), lambda i: (0, 0)),
            pl.BlockSpec((1, Cout), lambda i: (0, 0)),
            pl.BlockSpec((1, Cout), lambda i: (0, 0)),
        ],
        out_specs=pl.BlockSpec((1, H, W, Cout), lambda i: (i, 0, 0, 0)),
        compiler_params=pltpu.CompilerParams(dimension_semantics=("parallel",)),
    )(xpad, w_flat, scale, shift)


def conv3x3_bn_prelu_res(x_nhwc, res_nhwc, w_flat, scale, shift, alpha):
    B, H, W, Cin = x_nhwc.shape
    Cout = w_flat.shape[-1]
    xpad = jnp.pad(x_nhwc, ((0, 0), (1, 1), (1, 1), (0, 0)))
    kernel = functools.partial(_conv3x3_bn_prelu_res_kernel,
                               H=H, W=W, Cin=Cin, Cout=Cout, alpha=alpha)
    return pl.pallas_call(
        kernel,
        out_shape=(jax.ShapeDtypeStruct((B, H, W, Cout), jnp.float32),
                   jax.ShapeDtypeStruct((B, H, W, Cout), jnp.float32)),
        grid=(B,),
        in_specs=[
            pl.BlockSpec((1, H + 2, W + 2, Cin), lambda i: (i, 0, 0, 0)),
            pl.BlockSpec((1, H, W, Cout), lambda i: (i, 0, 0, 0)),
            pl.BlockSpec((9 * Cin, Cout), lambda i: (0, 0)),
            pl.BlockSpec((1, Cout), lambda i: (0, 0)),
            pl.BlockSpec((1, Cout), lambda i: (0, 0)),
        ],
        out_specs=(pl.BlockSpec((1, H, W, Cout), lambda i: (i, 0, 0, 0)),
                   pl.BlockSpec((1, H, W, Cout), lambda i: (i, 0, 0, 0))),
        compiler_params=pltpu.CompilerParams(dimension_semantics=("parallel",)),
    )(xpad, res_nhwc, w_flat, scale, shift)


# ---------------------------------------------------------------------------
# Kernel 2: fused PAB scores (all 4) + softmax + M_Relax + V + warp + blend +
#           disparity.  Grid over B*H rows, R rows per step.
# ---------------------------------------------------------------------------
def _pam_score_final_kernel(*refs, n_pab, R, W, C):
    fl_refs = refs[0:n_pab]                               # left head outputs
    fr_refs = refs[n_pab:2 * n_pab]                       # right head outputs
    wq_ref, bq_ref, wk_ref, bk_ref = refs[2 * n_pab:2 * n_pab + 4]
    c0_ref, c1_ref, xl_ref, xr_ref = refs[2 * n_pab + 4:2 * n_pab + 8]
    (ol_ref, or_ref, d1_ref, d2_ref,
     m0_ref, m1_ref, vl_ref, vr_ref) = refs[2 * n_pab + 8:]

    # ---- score accumulation: cost never round-trips HBM between PABs -------
    c0 = c0_ref[...]                                      # (R, W, W)
    c1 = c1_ref[...]
    for p in range(n_pab):                                # static unroll (4)
        fl1 = fl_refs[p][...].reshape(R * W, C)
        fr1 = fr_refs[p][...].reshape(R * W, C)
        Q = jnp.dot(fl1, wq_ref[p], preferred_element_type=jnp.float32) + bq_ref[p]
        K = jnp.dot(fr1, wk_ref[p], preferred_element_type=jnp.float32) + bk_ref[p]
        Q = Q.reshape(R, W, C)
        K = K.reshape(R, W, C)
        Q = Q - jnp.mean(Q, axis=1, keepdims=True)        # mean over width
        K = K - jnp.mean(K, axis=1, keepdims=True)
        # score and score^T both straight off the MXU (no XLU transpose)
        c0 = c0 + jnp.einsum('rik,rjk->rij', Q, K,
                             preferred_element_type=jnp.float32)
        c1 = c1 + jnp.einsum('rik,rjk->rij', K, Q,
                             preferred_element_type=jnp.float32)

    # ---- softmax ------------------------------------------------------------
    def _softmax(x):
        m = jnp.max(x, axis=-1, keepdims=True)
        e = jnp.exp(x - m)
        return e / jnp.sum(e, axis=-1, keepdims=True)

    M_r2l = _softmax(c0)                                  # (R, W, W)
    M_l2r = _softmax(c1)

    # ---- validity masks: V = diag((band @ M_a) @ M_b), band = |i-j| <= 2 ----
    ii = jax.lax.broadcasted_iota(jnp.int32, (R, W, W), 1)
    jj = jax.lax.broadcasted_iota(jnp.int32, (R, W, W), 2)
    band = (jnp.abs(ii - jj) <= 2).astype(jnp.float32)
    eye = (ii == jj).astype(jnp.float32)

    r_r2l = jnp.einsum('rij,rjk->rik', band, M_r2l,
                       preferred_element_type=jnp.float32)
    r_l2r = jnp.einsum('rij,rjk->rik', band, M_l2r,
                       preferred_element_type=jnp.float32)
    D_l = jnp.einsum('rik,rkj->rij', r_r2l, M_l2r,
                     preferred_element_type=jnp.float32)
    D_r = jnp.einsum('rik,rkj->rij', r_l2r, M_r2l,
                     preferred_element_type=jnp.float32)
    V_l = jnp.sum(D_l * eye, axis=-1, keepdims=True)      # (R, W, 1) diagonal
    V_r = jnp.sum(D_r * eye, axis=-1, keepdims=True)
    Vlt = jnp.tanh(5.0 * V_l)
    Vrt = jnp.tanh(5.0 * V_r)

    # ---- stereo warping + blend ---------------------------------------------
    xl = xl_ref[...]                                      # (R, W, C)
    xr = xr_ref[...]
    xlT = jnp.einsum('rij,rjc->ric', M_r2l, xr, preferred_element_type=jnp.float32)
    xrT = jnp.einsum('rij,rjc->ric', M_l2r, xl, preferred_element_type=jnp.float32)
    ol_ref[...] = xl * (1.0 - Vlt) + xlT * Vlt
    or_ref[...] = xr * (1.0 - Vrt) + xrT * Vrt

    # ---- disparity (lane-dense (R, W) outputs) ------------------------------
    idx = jax.lax.broadcasted_iota(jnp.float32, (R, W, W), 2)
    d1_ref[...] = jnp.sum(M_r2l * idx, axis=-1)
    d2_ref[...] = jnp.sum(M_l2r * idx, axis=-1)

    m0_ref[...] = M_r2l
    m1_ref[...] = M_l2r
    vl_ref[...] = Vlt
    vr_ref[...] = Vrt


def _pick_rows(bh, cap=8):
    # Largest divisor of bh (<= cap) that keeps 2-D (R, W) output blocks legal
    # (second-to-last block dim a multiple of 8 or the full extent).
    for r in range(min(cap, bh), 0, -1):
        if bh % r == 0 and (r % 8 == 0 or r == bh):
            return r
    return bh


def pam_score_final(f1_list, wq_s, bq_s, wk_s, bk_s, cost0, cost1, xl, xr):
    n_pab = len(f1_list)
    BH, W, C = xl.shape
    R = _pick_rows(BH)
    nblk = BH // R

    # Each f1 array is the concatenated [left | right] slab (2*BH, W, C); the
    # same array is passed twice with different index maps (no extra copies).
    blk_f_l = pl.BlockSpec((R, W, C), lambda i: (i, 0, 0))
    blk_f_r = pl.BlockSpec((R, W, C), lambda i: (i + nblk, 0, 0))
    blk_wcc = pl.BlockSpec((n_pab, C, C), lambda i: (0, 0, 0))
    blk_wb = pl.BlockSpec((n_pab, 1, C), lambda i: (0, 0, 0))
    blk_ww = pl.BlockSpec((R, W, W), lambda i: (i, 0, 0))
    blk_wc = pl.BlockSpec((R, W, C), lambda i: (i, 0, 0))
    blk_w = pl.BlockSpec((R, W), lambda i: (i, 0))
    blk_w1 = pl.BlockSpec((R, W, 1), lambda i: (i, 0, 0))

    kernel = functools.partial(_pam_score_final_kernel,
                               n_pab=n_pab, R=R, W=W, C=C)
    return pl.pallas_call(
        kernel,
        out_shape=(
            jax.ShapeDtypeStruct((BH, W, C), jnp.float32),   # out_left rows
            jax.ShapeDtypeStruct((BH, W, C), jnp.float32),   # out_right rows
            jax.ShapeDtypeStruct((BH, W), jnp.float32),      # disp1 (lane-dense)
            jax.ShapeDtypeStruct((BH, W), jnp.float32),      # disp2 (lane-dense)
            jax.ShapeDtypeStruct((BH, W, W), jnp.float32),   # M_right_to_left
            jax.ShapeDtypeStruct((BH, W, W), jnp.float32),   # M_left_to_right
            jax.ShapeDtypeStruct((BH, W, 1), jnp.float32),   # V_left_tanh
            jax.ShapeDtypeStruct((BH, W, 1), jnp.float32),   # V_right_tanh
        ),
        grid=(nblk,),
        in_specs=([blk_f_l] * n_pab + [blk_f_r] * n_pab +
                  [blk_wcc, blk_wb, blk_wcc, blk_wb,
                   blk_ww, blk_ww, blk_wc, blk_wc]),
        out_specs=(blk_wc, blk_wc, blk_w, blk_w, blk_ww, blk_ww, blk_w1, blk_w1),
        compiler_params=pltpu.CompilerParams(dimension_semantics=("parallel",)),
    )(*f1_list, *f1_list, wq_s, bq_s, wk_s, bk_s, cost0, cost1, xl, xr)


# ---------------------------------------------------------------------------
# Glue (parameter folding + layout plumbing).
# ---------------------------------------------------------------------------
def _fold_bn(bias, gamma, beta, mean, var, eps=1e-5):
    scale = gamma / jnp.sqrt(var + eps)
    shift = (bias - mean) * scale + beta
    return scale.reshape(1, -1), shift.reshape(1, -1)


def pam_forward(x_left, x_right, fea_left, fea_right, cost0, cost1, params,
                is_training=False):
    b, c, h, w = fea_left.shape
    fl = jnp.transpose(fea_left, (0, 2, 3, 1))            # NCHW -> NHWC
    fr = jnp.transpose(fea_right, (0, 2, 3, 1))
    f = jnp.concatenate([fl, fr], axis=0)                 # (2b, h, w, c): [left | right]

    f1_list = []
    for p in params["pabs"]:                              # 4 PAB heads (left+right at once)
        s1, t1 = _fold_bn(p["b1"], *p["bn1"])
        w1f = p["w1"].reshape(-1, p["w1"].shape[-1])      # (9*Cin, Cmid) im2col weight
        y = conv3x3_bn_prelu(f, w1f, s1, t1, p["a1"])
        s2, t2 = _fold_bn(p["b2"], *p["bn2"])
        w2f = p["w2"].reshape(-1, p["w2"].shape[-1])      # (9*Cmid, C)
        f1, f = conv3x3_bn_prelu_res(y, f, w2f, s2, t2, p["a2"])
        f1_list.append(f1.reshape(2 * b * h, w, c))       # contiguous fold (bitcast)

    wq_s = jnp.stack([p["wq"] for p in params["pabs"]], axis=0)          # (4, C, C)
    bq_s = jnp.stack([p["bq_b"].reshape(1, c) for p in params["pabs"]], axis=0)
    wk_s = jnp.stack([p["wk"] for p in params["pabs"]], axis=0)
    bk_s = jnp.stack([p["bk_b"].reshape(1, c) for p in params["pabs"]], axis=0)

    xl = jnp.transpose(x_left, (0, 2, 3, 1)).reshape(b * h, w, c)
    xr = jnp.transpose(x_right, (0, 2, 3, 1)).reshape(b * h, w, c)

    ol, orr, d1, d2, m0, m1, vl, vr = pam_score_final(
        f1_list, wq_s, bq_s, wk_s, bk_s, cost0, cost1, xl, xr)

    out_left = jnp.transpose(ol.reshape(b, h, w, c), (0, 3, 1, 2))
    out_right = jnp.transpose(orr.reshape(b, h, w, c), (0, 3, 1, 2))
    disp1 = d1.reshape(b, 1, h, w)
    disp2 = d2.reshape(b, 1, h, w)
    V_left_tanh = vl.reshape(b, 1, h, w)
    V_right_tanh = vr.reshape(b, 1, h, w)
    return (out_left, out_right, disp1, disp2,
            (m0.reshape(b, h, w, w), m1.reshape(b, h, w, w)),
            (V_left_tanh, V_right_tanh))


# ---------------------------------------------------------------------------
# Pure-JAX reference (for validation).
# ---------------------------------------------------------------------------
def _ref_conv_bn_prelu(x, w9, b, bn, alpha):
    Cin, Cout = w9.shape[1], w9.shape[2]
    w = w9.reshape(3, 3, Cin, Cout)
    y = jax.lax.conv_general_dilated(
        x, w, (1, 1), "SAME", dimension_numbers=("NHWC", "HWIO", "NHWC")) + b
    gamma, beta, mean, var = bn
    y = (y - mean) / jnp.sqrt(var + 1e-5) * gamma + beta
    return jnp.where(y >= 0.0, y, alpha * y)


def _ref_head(x, p):
    y = _ref_conv_bn_prelu(x, p["w1"], p["b1"], p["bn1"], p["a1"])
    return _ref_conv_bn_prelu(y, p["w2"], p["b2"], p["bn2"], p["a2"])


def _ref_m_relax(M, num_pixels=2):
    out = M
    for i in range(1, num_pixels + 1):
        out = out + jnp.pad(M[:, :-i, :], ((0, 0), (i, 0), (0, 0)))
        out = out + jnp.pad(M[:, i:, :], ((0, 0), (0, i), (0, 0)))
    return out


def ref_pam(x_left, x_right, fea_left, fea_right, cost0, cost1, params):
    b, c, h, w = fea_left.shape
    fl = jnp.transpose(fea_left, (0, 2, 3, 1))
    fr = jnp.transpose(fea_right, (0, 2, 3, 1))
    c0, c1 = cost0, cost1
    for p in params["pabs"]:
        fl1 = _ref_head(fl, p)
        fr1 = _ref_head(fr, p)
        Q = jnp.einsum("bhwc,cd->bhwd", fl1, p["wq"]) + p["bq_b"]
        K = jnp.einsum("bhwc,cd->bhwd", fr1, p["wk"]) + p["bk_b"]
        Q = Q - jnp.mean(Q, axis=2, keepdims=True)
        K = K - jnp.mean(K, axis=2, keepdims=True)
        score = jnp.einsum("bhic,bhjc->bhij", Q, K).reshape(b * h, w, w)
        c0 = c0 + score
        c1 = c1 + jnp.transpose(score, (0, 2, 1))
        fl = fl + fl1
        fr = fr + fr1
    M_r2l = jax.nn.softmax(c0, axis=-1)
    M_l2r = jax.nn.softmax(c1, axis=-1)
    r_r2l = _ref_m_relax(M_r2l)
    r_l2r = _ref_m_relax(M_l2r)
    V_l = jnp.sum(r_r2l * jnp.transpose(M_l2r, (0, 2, 1)), axis=-1)
    V_r = jnp.sum(r_l2r * jnp.transpose(M_r2l, (0, 2, 1)), axis=-1)
    Vlt = jnp.tanh(5.0 * V_l).reshape(b, 1, h, w)
    Vrt = jnp.tanh(5.0 * V_r).reshape(b, 1, h, w)
    xl = jnp.transpose(x_left, (0, 2, 3, 1)).reshape(b * h, w, c)
    xr = jnp.transpose(x_right, (0, 2, 3, 1)).reshape(b * h, w, c)
    xlT = jnp.transpose(jnp.einsum("nij,njc->nic", M_r2l, xr).reshape(b, h, w, c),
                        (0, 3, 1, 2))
    xrT = jnp.transpose(jnp.einsum("nij,njc->nic", M_l2r, xl).reshape(b, h, w, c),
                        (0, 3, 1, 2))
    out_left = x_left * (1.0 - Vlt) + xlT * Vlt
    out_right = x_right * (1.0 - Vrt) + xrT * Vrt
    idx = jnp.arange(w, dtype=jnp.float32)
    disp1 = jnp.sum(M_r2l * idx, axis=-1).reshape(b, 1, h, w)
    disp2 = jnp.sum(M_l2r * idx, axis=-1).reshape(b, 1, h, w)
    return (out_left, out_right, disp1, disp2,
            (M_r2l.reshape(b, h, w, w), M_l2r.reshape(b, h, w, w)), (Vlt, Vrt))


# ---------------------------------------------------------------------------
# Deterministic parameter init (synthetic, mimics PAB.__init__ shapes).
# ---------------------------------------------------------------------------
def init_params(key, c):
    pabs = []
    for _ in range(4):
        key, *ks = jax.random.split(key, 13)
        p = {
            "w1": 0.1 * jax.random.normal(ks[0], (9, c, c // 2), jnp.float32),
            "b1": 0.1 * jax.random.normal(ks[1], (c // 2,), jnp.float32),
            "bn1": (1.0 + 0.1 * jax.random.normal(ks[2], (c // 2,), jnp.float32),
                    0.1 * jax.random.normal(ks[3], (c // 2,), jnp.float32),
                    0.05 * jax.random.normal(ks[4], (c // 2,), jnp.float32),
                    0.5 + jax.random.uniform(ks[5], (c // 2,), jnp.float32)),
            "a1": 0.25,
            "w2": 0.1 * jax.random.normal(ks[6], (9, c // 2, c), jnp.float32),
            "b2": 0.1 * jax.random.normal(ks[7], (c,), jnp.float32),
            "bn2": (1.0 + 0.1 * jax.random.normal(ks[8], (c,), jnp.float32),
                    0.1 * jax.random.normal(ks[9], (c,), jnp.float32),
                    0.05 * jax.random.normal(ks[10], (c,), jnp.float32),
                    0.5 + jax.random.uniform(ks[11], (c,), jnp.float32)),
            "a2": 0.25,
        }
        key, k1, k2, k3, k4 = jax.random.split(key, 5)
        p["wq"] = 0.1 * jax.random.normal(k1, (c, c), jnp.float32)
        p["bq_b"] = 0.1 * jax.random.normal(k2, (c,), jnp.float32)
        p["wk"] = 0.1 * jax.random.normal(k3, (c, c), jnp.float32)
        p["bk_b"] = 0.1 * jax.random.normal(k4, (c,), jnp.float32)
        pabs.append(p)
    return {"pabs": pabs}


if __name__ == "__main__":
    b, c, h, w = 2, 8, 8, 16
    key = jax.random.PRNGKey(0)
    k1, k2, k3, k4, k5 = jax.random.split(key, 5)
    x_left = jax.random.normal(k1, (b, c, h, w), jnp.float32)
    x_right = jax.random.normal(k2, (b, c, h, w), jnp.float32)
    fea_left = jax.random.normal(k3, (b, c, h, w), jnp.float32)
    fea_right = jax.random.normal(k4, (b, c, h, w), jnp.float32)
    cost0 = jnp.zeros((b * h, w, w), jnp.float32)
    cost1 = jnp.zeros((b * h, w, w), jnp.float32)
    params = init_params(k5, c)

    out = pam_forward(x_left, x_right, fea_left, fea_right, cost0, cost1, params,
                      is_training=False)
    out = jax.tree_util.tree_map(jax.block_until_ready, out)

    ref = ref_pam(x_left, x_right, fea_left, fea_right, cost0, cost1, params)
    for got, want in zip(jax.tree_util.tree_leaves(out),
                         jax.tree_util.tree_leaves(ref)):
        np.testing.assert_allclose(np.asarray(got), np.asarray(want),
                                   rtol=5e-4, atol=5e-4)
    print("KERNEL_OK")
</pallas_src>

<mosaic_0001>
module attributes {stable_mosaic.version = 11 : i64} {
  func.func @_conv3x3_bn_prelu_kernel(%arg0: i32, %arg1: memref<1x10x18x8xf32, #tpu.memory_space<vmem>>, %arg2: memref<72x4xf32, #tpu.memory_space<vmem>>, %arg3: memref<1x4xf32, #tpu.memory_space<vmem>>, %arg4: memref<1x4xf32, #tpu.memory_space<vmem>>, %arg5: memref<1x8x16x4xf32, #tpu.memory_space<vmem>>) attributes {dimension_semantics = [#tpu.dimension_semantics<parallel>], iteration_bounds = array<i64: 4>, scalar_prefetch = 0 : i64, scratch_operands = 0 : i64, tpu.core_type = #tpu.core_type<tc>, window_params = [{transform_indices = @transform_0, window_bounds = array<i64: 1, 10, 18, 8>}, {pipeline_mode = #tpu.pipeline_mode<synchronous>, transform_indices = @transform_1, window_bounds = array<i64: 72, 4>}, {pipeline_mode = #tpu.pipeline_mode<synchronous>, transform_indices = @transform_2, window_bounds = array<i64: 1, 4>}, {pipeline_mode = #tpu.pipeline_mode<synchronous>, transform_indices = @transform_3, window_bounds = array<i64: 1, 4>}, {transform_indices = @transform_4, window_bounds = array<i64: 1, 8, 16, 4>}]} {
    %c0 = arith.constant 0 : index
    %c0_0 = arith.constant 0 : index
    %c0_1 = arith.constant 0 : index
    %c0_2 = arith.constant 0 : index
    %0 = vector.load %arg1[%c0, %c0_0, %c0_1, %c0_2] : memref<1x10x18x8xf32, #tpu.memory_space<vmem>>, vector<1x10x18x8xf32>
    %1 = vector.shape_cast %0 : vector<1x10x18x8xf32> to vector<10x18x8xf32>
    %2 = vector.extract_strided_slice %1 {offsets = [0, 0, 0], sizes = [8, 16, 8], strides = [1, 1, 1]} : vector<10x18x8xf32> to vector<8x16x8xf32>
    %3 = vector.shape_cast %2 : vector<8x16x8xf32> to vector<128x8xf32>
    %4 = vector.extract_strided_slice %1 {offsets = [0, 1, 0], sizes = [8, 16, 8], strides = [1, 1, 1]} : vector<10x18x8xf32> to vector<8x16x8xf32>
    %5 = vector.shape_cast %4 : vector<8x16x8xf32> to vector<128x8xf32>
    %6 = vector.extract_strided_slice %1 {offsets = [0, 2, 0], sizes = [8, 16, 8], strides = [1, 1, 1]} : vector<10x18x8xf32> to vector<8x16x8xf32>
    %7 = vector.shape_cast %6 : vector<8x16x8xf32> to vector<128x8xf32>
    %8 = vector.extract_strided_slice %1 {offsets = [1, 0, 0], sizes = [8, 16, 8], strides = [1, 1, 1]} : vector<10x18x8xf32> to vector<8x16x8xf32>
    %9 = vector.shape_cast %8 : vector<8x16x8xf32> to vector<128x8xf32>
    %10 = vector.extract_strided_slice %1 {offsets = [1, 1, 0], sizes = [8, 16, 8], strides = [1, 1, 1]} : vector<10x18x8xf32> to vector<8x16x8xf32>
    %11 = vector.shape_cast %10 : vector<8x16x8xf32> to vector<128x8xf32>
    %12 = vector.extract_strided_slice %1 {offsets = [1, 2, 0], sizes = [8, 16, 8], strides = [1, 1, 1]} : vector<10x18x8xf32> to vector<8x16x8xf32>
    %13 = vector.shape_cast %12 : vector<8x16x8xf32> to vector<128x8xf32>
    %14 = vector.extract_strided_slice %1 {offsets = [2, 0, 0], sizes = [8, 16, 8], strides = [1, 1, 1]} : vector<10x18x8xf32> to vector<8x16x8xf32>
    %15 = vector.shape_cast %14 : vector<8x16x8xf32> to vector<128x8xf32>
    %16 = vector.extract_strided_slice %1 {offsets = [2, 1, 0], sizes = [8, 16, 8], strides = [1, 1, 1]} : vector<10x18x8xf32> to vector<8x16x8xf32>
    %17 = vector.shape_cast %16 : vector<8x16x8xf32> to vector<128x8xf32>
    %18 = vector.extract_strided_slice %1 {offsets = [2, 2, 0], sizes = [8, 16, 8], strides = [1, 1, 1]} : vector<10x18x8xf32> to vector<8x16x8xf32>
    %19 = vector.shape_cast %18 : vector<8x16x8xf32> to vector<128x8xf32>
    %20 = tpu.concatenate %3, %5, %7, %9, %11, %13, %15, %17, %19 in 1 : vector<128x8xf32>, vector<128x8xf32>, vector<128x8xf32>, vector<128x8xf32>, vector<128x8xf32>, vector<128x8xf32>, vector<128x8xf32>, vector<128x8xf32>, vector<128x8xf32> -> vector<128x72xf32>
    %c0_3 = arith.constant 0 : index
    %c0_4 = arith.constant 0 : index
    %21 = vector.load %arg2[%c0_3, %c0_4] : memref<72x4xf32, #tpu.memory_space<vmem>>, vector<72x4xf32>
    %cst = arith.constant dense<0.000000e+00> : vector<128x4xf32>
    %22 = tpu.matmul %20, %21, %cst {dimension_numbers = #tpu.dot_dimension_numbers<[1], [0], [0], [1], [0, 0, 1, 1], [], []>, precision = #tpu.contract_precision<fp32>} : vector<128x72xf32>, vector<72x4xf32>, vector<128x4xf32> -> vector<128x4xf32>
    %c0_5 = arith.constant 0 : index
    %c0_6 = arith.constant 0 : index
    %23 = vector.load %arg3[%c0_5, %c0_6] : memref<1x4xf32, #tpu.memory_space<vmem>>, vector<1x4xf32>
    %24 = vector.broadcast %23 : vector<1x4xf32> to vector<128x4xf32>
    %25 = arith.mulf %22, %24 : vector<128x4xf32>
    %c0_7 = arith.constant 0 : index
    %c0_8 = arith.constant 0 : index
    %26 = vector.load %arg4[%c0_7, %c0_8] : memref<1x4xf32, #tpu.memory_space<vmem>>, vector<1x4xf32>
    %27 = vector.broadcast %26 : vector<1x4xf32> to vector<128x4xf32>
    %28 = arith.addf %25, %27 : vector<128x4xf32>
    %cst_9 = arith.constant 0.000000e+00 : f32
    %29 = vector.broadcast %cst_9 : f32 to vector<128x4xf32>
    %30 = arith.cmpf oge, %28, %29 : vector<128x4xf32>
    %cst_10 = arith.constant 2.500000e-01 : f32
    %31 = vector.broadcast %cst_10 : f32 to vector<128x4xf32>
    %32 = arith.mulf %31, %28 : vector<128x4xf32>
    %33 = arith.select %30, %28, %32 : vector<128x4xi1>, vector<128x4xf32>
    %34 = vector.shape_cast %33 : vector<128x4xf32> to vector<8x16x4xf32>
    %c0_11 = arith.constant 0 : index
    %c0_12 = arith.constant 0 : index
    %c0_13 = arith.constant 0 : index
    %c0_14 = arith.constant 0 : index
    %35 = vector.load %arg5[%c0_11, %c0_12, %c0_13, %c0_14] : memref<1x8x16x4xf32, #tpu.memory_space<vmem>>, vector<1x8x16x4xf32>
    %36 = vector.shape_cast %35 : vector<1x8x16x4xf32> to vector<8x16x4xf32>
    %37 = vector.shape_cast %34 : vector<8x16x4xf32> to vector<1x8x16x4xf32>
    tpu.vector_store %arg5[%c0_11, %c0_12, %c0_13, %c0_14], %37 {strides = array<i32>} : memref<1x8x16x4xf32, #tpu.memory_space<vmem>>, vector<1x8x16x4xf32>,
    return
  }
  func.func @transform_0(%arg0: i32) -> (i32, i32, i32, i32) {
    %c0_i32 = arith.constant 0 : i32
    %c0_i32_0 = arith.constant 0 : i32
    %c0_i32_1 = arith.constant 0 : i32
    %c0_i32_2 = arith.constant 0 : i32
    return %arg0, %c0_i32, %c0_i32_0, %c0_i32_1 : i32, i32, i32, i32
  }
  func.func @transform_1(%arg0: i32) -> (i32, i32) {
    %c0_i32 = arith.constant 0 : i32
    %c0_i32_0 = arith.constant 0 : i32
    %c0_i32_1 = arith.constant 0 : i32
    return %c0_i32, %c0_i32_0 : i32, i32
  }
  func.func @transform_2(%arg0: i32) -> (i32, i32) {
    %c0_i32 = arith.constant 0 : i32
    %c0_i32_0 = arith.constant 0 : i32
    %c0_i32_1 = arith.constant 0 : i32
    return %c0_i32, %c0_i32_0 : i32, i32
  }
  func.func @transform_3(%arg0: i32) -> (i32, i32) {
    %c0_i32 = arith.constant 0 : i32
    %c0_i32_0 = arith.constant 0 : i32
    %c0_i32_1 = arith.constant 0 : i32
    return %c0_i32, %c0_i32_0 : i32, i32
  }
  func.func @transform_4(%arg0: i32) -> (i32, i32, i32, i32) {
    %c0_i32 = arith.constant 0 : i32
    %c0_i32_0 = arith.constant 0 : i32
    %c0_i32_1 = arith.constant 0 : i32
    %c0_i32_2 = arith.constant 0 : i32
    return %arg0, %c0_i32, %c0_i32_0, %c0_i32_1 : i32, i32, i32, i32
  }
}

</mosaic_0001>

<llo_original>
// kernel: tpu_custom_call.1
$region0: #{tpu_custom_call.1}
  #allocation0 [shape = 'u32[]', space=smem, size = 0x4, offset = 0x4, fixed_abs, tag = 'smem constant byte address 0x4 - core index']
  #allocation1 [shape = 'u32[72,128]{1,0:T(1,128)}', space=vmem, size = 0x9000, scoped, tag = 'internal scratch']
  %s0 = inlined_call_operand.vmem [shape: f32[4,10,18,8], index: 0, kind: input, shape index: {}]
  %s1 = inlined_call_operand.vmem [shape: f32[72,4], index: 1, kind: input, shape index: {}]
  %s2 = inlined_call_operand.vmem [shape: f32[1,4], index: 2, kind: input, shape index: {}]
  %s3 = inlined_call_operand.vmem [shape: f32[1,4], index: 3, kind: input, shape index: {}]
  %s4 = inlined_call_operand.vmem [shape: f32[4,8,16,4], index: 4, kind: output, shape index: {}]
  %s5 = sld [smem:[#allocation0]]
  $region49: #{tpu_custom_call.1} parent=0
    _
  %s7 = ssub.s32 1, %s5
  %s8 = scalar_select 0, %s7, %s5
  loop: start=0, step=1, limit=6
  $region2: #{tpu_custom_call.1} parent=0 // loop_pre_header
    _
  $region3: #{tpu_custom_call.1} parent=0 // loop_header
    %s10 = sphi 0, %s14
    %p11 = scmp.ge.s32.totalorder %s10, 6
    %s20 = sphi 0, %s22
    %s23 = sphi 0, %s20
    %s24 = sphi 0, %s23
    %s40 = sphi 0, %s24
    %s44 = sphi 0, %s44
    %s46 = sphi 0, %s44
    %s47 = sphi 0, %s46
    %s61 = sphi 0, %s47
    %s65 = sphi 0, %s65
    %s67 = sphi 0, %s65
    %s68 = sphi 0, %s67
    %s82 = sphi 0, %s68
    %s86 = sphi 0, %s86
    %s88 = sphi 0, %s86
    %s89 = sphi 0, %s88
    %s103 = sphi 0, %s89
    %s109 = sphi 0, %s111
    %s112 = sphi 0, %s109
    %s113 = sphi 0, %s112
    %s129 = sphi 0, %s113
  $region4: #{tpu_custom_call.1} parent=0 // loop_header_branch
    %13 = sbr.rel (%p11) target = $region8
  $region5: #{tpu_custom_call.1} parent=0 // loop_body
    %s15 = ssub.s32 %s10, 1
    %s16 = ssub.s32 %s10, 2
    %s17 = sadd.s32 %s10, 1
    %s18 = ssub.s32 %s10, %s17
    %p19 = scmp.eq.s32.totalorder %s18, 0
    %s21 = sadd.s32 %s20, 1
    %s22 = scalar_select %p19, %s20, %s21
    %p25 = pneg %p19
    %p26 = scmp.eq.s32.totalorder %s10, 3
    %p27 = por %p25, %p26
    %p28 = scmp.ne.s32.totalorder %s20, %s23
    %p29 = scmp.eq.s32.totalorder %s10, 0
    %p30 = por %p28, %p29
    %p31 = scmp.ne.s32.totalorder %s20, %s23
    %p32 = scmp.eq.s32.totalorder %s15, 3
    %p33 = por %p31, %p32
    %p34 = scmp.ne.s32.totalorder %s23, %s24
    %p35 = scmp.eq.s32.totalorder %s15, 0
    %p36 = por %p34, %p35
    %p37 = scmp.ne.s32.totalorder %s23, %s24
    %p38 = scmp.eq.s32.totalorder %s16, 3
    %p39 = por %p37, %p38
    %p41 = scmp.ne.s32.totalorder %s24, %s40
    %p42 = scmp.eq.s32.totalorder %s16, 0
    %p43 = por %p41, %p42
    %s45 = sadd.s32 %s44, 1
    %p48 = scmp.eq.s32.totalorder %s10, 3
    %p49 = scmp.ne.s32.totalorder %s44, %s46
    %p50 = scmp.eq.s32.totalorder %s10, 0
    %p51 = por %p49, %p50
    %p52 = scmp.ne.s32.totalorder %s44, %s46
    %p53 = scmp.eq.s32.totalorder %s15, 3
    %p54 = por %p52, %p53
    %p55 = scmp.ne.s32.totalorder %s46, %s47
    %p56 = scmp.eq.s32.totalorder %s15, 0
    %p57 = por %p55, %p56
    %p58 = scmp.ne.s32.totalorder %s46, %s47
    %p59 = scmp.eq.s32.totalorder %s16, 3
    %p60 = por %p58, %p59
    %p62 = scmp.ne.s32.totalorder %s47, %s61
    %p63 = scmp.eq.s32.totalorder %s16, 0
    %p64 = por %p62, %p63
    %s66 = sadd.s32 %s65, 1
    %p69 = scmp.eq.s32.totalorder %s10, 3
    %p70 = scmp.ne.s32.totalorder %s65, %s67
    %p71 = scmp.eq.s32.totalorder %s10, 0
    %p72 = por %p70, %p71
    %p73 = scmp.ne.s32.totalorder %s65, %s67
    %p74 = scmp.eq.s32.totalorder %s15, 3
    %p75 = por %p73, %p74
    %p76 = scmp.ne.s32.totalorder %s67, %s68
    %p77 = scmp.eq.s32.totalorder %s15, 0
    %p78 = por %p76, %p77
    %p79 = scmp.ne.s32.totalorder %s67, %s68
    %p80 = scmp.eq.s32.totalorder %s16, 3
    %p81 = por %p79, %p80
    %p83 = scmp.ne.s32.totalorder %s68, %s82
    %p84 = scmp.eq.s32.totalorder %s16, 0
    %p85 = por %p83, %p84
    %s87 = sadd.s32 %s86, 1
    %p90 = scmp.eq.s32.totalorder %s10, 3
    %p91 = scmp.ne.s32.totalorder %s86, %s88
    %p92 = scmp.eq.s32.totalorder %s10, 0
    %p93 = por %p91, %p92
    %p94 = scmp.ne.s32.totalorder %s86, %s88
    %p95 = scmp.eq.s32.totalorder %s15, 3
    %p96 = por %p94, %p95
    %p97 = scmp.ne.s32.totalorder %s88, %s89
    %p98 = scmp.eq.s32.totalorder %s15, 0
    %p99 = por %p97, %p98
    %p100 = scmp.ne.s32.totalorder %s88, %s89
    %p101 = scmp.eq.s32.totalorder %s16, 3
    %p102 = por %p100, %p101
    %p104 = scmp.ne.s32.totalorder %s89, %s103
    %p105 = scmp.eq.s32.totalorder %s16, 0
    %p106 = por %p104, %p105
    %s107 = ssub.s32 %s10, %s17
    %p108 = scmp.eq.s32.totalorder %s107, 0
    %s110 = sadd.s32 %s109, 1
    %s111 = scalar_select %p108, %s109, %s110
    %p114 = pneg %p108
    %p115 = scmp.eq.s32.totalorder %s10, 3
    %p116 = por %p114, %p115
    %p117 = scmp.ne.s32.totalorder %s109, %s112
    %p118 = scmp.eq.s32.totalorder %s10, 0
    %p119 = por %p117, %p118
    %p120 = scmp.ne.s32.totalorder %s109, %s112
    %p121 = scmp.eq.s32.totalorder %s15, 3
    %p122 = por %p120, %p121
    %p123 = scmp.ne.s32.totalorder %s112, %s113
    %p124 = scmp.eq.s32.totalorder %s15, 0
    %p125 = por %p123, %p124
    %p126 = scmp.ne.s32.totalorder %s112, %s113
    %p127 = scmp.eq.s32.totalorder %s16, 3
    %p128 = por %p126, %p127
    %p130 = scmp.ne.s32.totalorder %s113, %s129
    %p131 = scmp.eq.s32.totalorder %s16, 0
    %p132 = por %p130, %p131
    %p133 = scmp.le.s32.totalorder 1, %s10
    %p134 = scmp.lt.s32.totalorder %s10, 5
    %p135 = pnand %p133, %p134
    %p136 = pneg %p135
    // Predicated region
    $region9: #{tpu_custom_call.1} parent=5 // pred_check
      _
    $region10: #{tpu_custom_call.1} parent=5 // pred_check_branch
      %138 = sbr.rel (%p135) target = $region12
    $region11: #{tpu_custom_call.1} parent=5 // pred_region
      %s139 = ssub.s32 %s10, 1
      // Predicated region
      $region13: #{tpu_custom_call.1} parent=11 // pred_check
        %p140 = pneg %p57
      $region14: #{tpu_custom_call.1} parent=11 // pred_check_branch
        %142 = sbr.rel (%p140) target = $region16
      $region15: #{tpu_custom_call.1} parent=11 // pred_region
        _
      $region16: #{tpu_custom_call.1} parent=11 // pred_fallthru
        _
      // Predicated region
      $region17: #{tpu_custom_call.1} parent=11 // pred_check
        %p143 = pneg %p78
      $region18: #{tpu_custom_call.1} parent=11 // pred_check_branch
        %145 = sbr.rel (%p143) target = $region20
      $region19: #{tpu_custom_call.1} parent=11 // pred_region
        _
      $region20: #{tpu_custom_call.1} parent=11 // pred_fallthru
        _
      // Predicated region
      $region21: #{tpu_custom_call.1} parent=11 // pred_check
        %p146 = pneg %p99
      $region22: #{tpu_custom_call.1} parent=11 // pred_check_branch
        %148 = sbr.rel (%p146) target = $region24
      $region23: #{tpu_custom_call.1} parent=11 // pred_region
        _
      $region24: #{tpu_custom_call.1} parent=11 // pred_fallthru
        _
    $region12: #{tpu_custom_call.1} parent=5 // pred_fallthru
      _
    %p149 = scmp.lt.s32.totalorder %s10, 4
    // Predicated region
    $region25: #{tpu_custom_call.1} parent=5 // pred_check
      %p150 = pneg %p149
    $region26: #{tpu_custom_call.1} parent=5 // pred_check_branch
      %152 = sbr.rel (%p150) target = $region28
    $region27: #{tpu_custom_call.1} parent=5 // pred_region
      // Predicated region
      $region29: #{tpu_custom_call.1} parent=27 // pred_check
        %p153 = pneg %p30
      $region30: #{tpu_custom_call.1} parent=27 // pred_check_branch
        %155 = sbr.rel (%p153) target = $region32
      $region31: #{tpu_custom_call.1} parent=27 // pred_region
        %p156 = scmp.lt.s32.totalorder %s10, 3
        %s157 = scalar_select %p156, %s10, 3
        %s158 = smul.addr %s157, 30
        %s159 = smul.addr %s158, 8
        %s160 = scalar_lea.vmem %s0, %s159
      $region32: #{tpu_custom_call.1} parent=27 // pred_fallthru
        _
    $region28: #{tpu_custom_call.1} parent=5 // pred_fallthru
      _
    %p161 = scmp.le.s32.totalorder 1, %s10
    %p162 = scmp.lt.s32.totalorder %s10, 5
    %p163 = pnand %p161, %p162
    %p164 = pneg %p163
    // Predicated region
    $region33: #{tpu_custom_call.1} parent=5 // pred_check
      _
    $region34: #{tpu_custom_call.1} parent=5 // pred_check_branch
      %166 = sbr.rel (%p163) target = $region36
    $region35: #{tpu_custom_call.1} parent=5 // pred_region
      %s167 = ssub.s32 %s10, 1
      %p168 = scmp.lt.s32.totalorder %s15, 3
      %s169 = scalar_select %p168, %s15, 3
      %s170 = smul.addr %s169, 30
      %s171 = smul.addr %s170, 8
      %s172 = scalar_lea.vmem %s0, %s171
      %p173 = pneg %p36
      %p174 = pneg %p33
      %p175 = pneg %p57
      %p176 = pneg %p54
      %p177 = pneg %p78
      %p178 = pneg %p75
      %p179 = pneg %p99
      %p180 = pneg %p96
      %p181 = pneg %p125
      %p182 = pneg %p122
      %p183 = scmp.lt.s32.totalorder %s15, 3
      %s184 = scalar_select %p183, %s15, 3
      %s185 = smul.addr %s184, 16
      %s186 = smul.addr %s185, 8
      %s187 = scalar_lea.vmem %s4, %s186
      %p188 = scmp.lt.s32.totalorder %s15, 3
      %s189 = scalar_select %p188, %s15, 3
      %s190 = smul.addr %s189, 30
      %s191 = smul.addr %s190, 8
      %s192 = scalar_lea.vmem %s0, %s191
      %p193 = scmp.lt.s32.totalorder %s15, 3
      %s194 = scalar_select %p193, %s15, 3
      %s195 = smul.addr %s194, 16
      %s196 = smul.addr %s195, 8
      %s197 = scalar_lea.vmem %s4, %s196
      %v198 = vld [vmem:[%s192] sm:$0xff]
      %v199 = vld [vmem:[%s192 + $0x8] sm:$0xff]
      %v200 = vld [vmem:[%s192 + $0x10] sm:$0x3]
      %v201 = vld [vmem:[%s192 + $0x18] sm:$0xff]
      %v202 = vld [vmem:[%s192 + $0x20] sm:$0xff]
      %v203 = vld [vmem:[%s192 + $0x28] sm:$0x3]
      %v204 = vld [vmem:[%s192 + $0x30] sm:$0xff]
      %v205 = vld [vmem:[%s192 + $0x38] sm:$0xff]
      %v206 = vld [vmem:[%s192 + $0x40] sm:$0x3]
      %v207 = vld [vmem:[%s192 + $0x48] sm:$0xff]
      %v208 = vld [vmem:[%s192 + $0x50] sm:$0xff]
      %v209 = vld [vmem:[%s192 + $0x58] sm:$0x3]
      %v210 = vld [vmem:[%s192 + $0x60] sm:$0xff]
      %v211 = vld [vmem:[%s192 + $0x68] sm:$0xff]
      %v212 = vld [vmem:[%s192 + $0x70] sm:$0x3]
      %v213 = vld [vmem:[%s192 + $0x78] sm:$0xff]
      %v214 = vld [vmem:[%s192 + $0x80] sm:$0xff]
      %v215 = vld [vmem:[%s192 + $0x88] sm:$0x3]
      %v216 = vld [vmem:[%s192 + $0x90] sm:$0xff]
      %v217 = vld [vmem:[%s192 + $0x98] sm:$0xff]
      %v218 = vld [vmem:[%s192 + $0xa0] sm:$0x3]
      %v219 = vld [vmem:[%s192 + $0xa8] sm:$0xff]
      %v220 = vld [vmem:[%s192 + $0xb0] sm:$0xff]
      %v221 = vld [vmem:[%s192 + $0xb8] sm:$0x3]
      %v222 = vld [vmem:[%s192 + $0xc0] sm:$0xff]
      %v223 = vld [vmem:[%s192 + $0xc8] sm:$0xff]
      %v224 = vld [vmem:[%s192 + $0xd0] sm:$0x3]
      %v225 = vld [vmem:[%s192 + $0xd8] sm:$0xff]
      %v226 = vld [vmem:[%s192 + $0xe0] sm:$0xff]
      %v227 = vld [vmem:[%s192 + $0xe8] sm:$0x3]
      %vm252 = vcmask 1046528
      %v253 = vrot.slane %v198, 1
      %v254 = vrot.slane %v199, 1
      %v255 = vsel %vm252, %v253, %v254
      %v256 = vrot.slane %v200, 1
      %v257 = vsel %vm252, %v254, %v256
      %v258 = vrot.slane %v201, 1
      %v259 = vrot.slane %v202, 1
      %v260 = vsel %vm252, %v258, %v259
      %v261 = vrot.slane %v203, 1
      %v262 = vsel %vm252, %v259, %v261
      %v263 = vrot.slane %v204, 1
      %v264 = vrot.slane %v205, 1
      %v265 = vsel %vm252, %v263, %v264
      %v266 = vrot.slane %v206, 1
      %v267 = vsel %vm252, %v264, %v266
      %v268 = vrot.slane %v207, 1
      %v269 = vrot.slane %v208, 1
      %v270 = vsel %vm252, %v268, %v269
      %v271 = vrot.slane %v209, 1
      %v272 = vsel %vm252, %v269, %v271
      %v273 = vrot.slane %v210, 1
      %v274 = vrot.slane %v211, 1
      %v275 = vsel %vm252, %v273, %v274
      %v276 = vrot.slane %v212, 1
      %v277 = vsel %vm252, %v274, %v276
      %v278 = vrot.slane %v213, 1
      %v279 = vrot.slane %v214, 1
      %v280 = vsel %vm252, %v278, %v279
      %v281 = vrot.slane %v215, 1
      %v282 = vsel %vm252, %v279, %v281
      %v283 = vrot.slane %v216, 1
      %v284 = vrot.slane %v217, 1
      %v285 = vsel %vm252, %v283, %v284
      %v286 = vrot.slane %v218, 1
      %v287 = vsel %vm252, %v284, %v286
      %v288 = vrot.slane %v219, 1
      %v289 = vrot.slane %v220, 1
      %v290 = vsel %vm252, %v288, %v289
      %v291 = vrot.slane %v221, 1
      %v292 = vsel %vm252, %v289, %v291
      %vm293 = vcmask 1045504
      %v294 = vrot.slane %v198, 2
      %v295 = vrot.slane %v199, 2
      %v296 = vsel %vm293, %v294, %v295
      %v297 = vrot.slane %v200, 2
      %v298 = vsel %vm293, %v295, %v297
      %v299 = vrot.slane %v201, 2
      %v300 = vrot.slane %v202, 2
      %v301 = vsel %vm293, %v299, %v300
      %v302 = vrot.slane %v203, 2
      %v303 = vsel %vm293, %v300, %v302
      %v304 = vrot.slane %v204, 2
      %v305 = vrot.slane %v205, 2
      %v306 = vsel %vm293, %v304, %v305
      %v307 = vrot.slane %v206, 2
      %v308 = vsel %vm293, %v305, %v307
      %v309 = vrot.slane %v207, 2
      %v310 = vrot.slane %v208, 2
      %v311 = vsel %vm293, %v309, %v310
      %v312 = vrot.slane %v209, 2
      %v313 = vsel %vm293, %v310, %v312
      %v314 = vrot.slane %v210, 2
      %v315 = vrot.slane %v211, 2
      %v316 = vsel %vm293, %v314, %v315
      %v317 = vrot.slane %v212, 2
      %v318 = vsel %vm293, %v315, %v317
      %v319 = vrot.slane %v213, 2
      %v320 = vrot.slane %v214, 2
      %v321 = vsel %vm293, %v319, %v320
      %v322 = vrot.slane %v215, 2
      %v323 = vsel %vm293, %v320, %v322
      %v324 = vrot.slane %v216, 2
      %v325 = vrot.slane %v217, 2
      %v326 = vsel %vm293, %v324, %v325
      %v327 = vrot.slane %v218, 2
      %v328 = vsel %vm293, %v325, %v327
      %v329 = vrot.slane %v219, 2
      %v330 = vrot.slane %v220, 2
      %v331 = vsel %vm293, %v329, %v330
      %v332 = vrot.slane %v221, 2
      %v333 = vsel %vm293, %v330, %v332
      %v337 = vrot.slane %v222, 1
      %v338 = vrot.slane %v223, 1
      %v339 = vsel %vm252, %v337, %v338
      %v340 = vrot.slane %v224, 1
      %v341 = vsel %vm252, %v338, %v340
      %v342 = vrot.slane %v222, 2
      %v343 = vrot.slane %v223, 2
      %v344 = vsel %vm293, %v342, %v343
      %v345 = vrot.slane %v224, 2
      %v346 = vsel %vm293, %v343, %v345
      %v350 = vrot.slane %v225, 1
      %v351 = vrot.slane %v226, 1
      %v352 = vsel %vm252, %v350, %v351
      %v353 = vrot.slane %v227, 1
      %v354 = vsel %vm252, %v351, %v353
      %v355 = vrot.slane %v225, 2
      %v356 = vrot.slane %v226, 2
      %v357 = vsel %vm293, %v355, %v356
      %v358 = vrot.slane %v227, 2
      %v359 = vsel %vm293, %v356, %v358
      %360 = vrot.lane.b32.xlu0 %v255, 8
      %v361 = vpop.permute.xlu0 %360
      %362 = vrot.lane.b32.xlu0 %v257, 8
      %v363 = vpop.permute.xlu0 %362
      %364 = vrot.lane.b32.xlu0 %v260, 8
      %v365 = vpop.permute.xlu0 %364
      %366 = vrot.lane.b32.xlu0 %v262, 8
      %v367 = vpop.permute.xlu0 %366
      %368 = vrot.lane.b32.xlu0 %v265, 8
      %v369 = vpop.permute.xlu0 %368
      %370 = vrot.lane.b32.xlu0 %v267, 8
      %v371 = vpop.permute.xlu0 %370
      %372 = vrot.lane.b32.xlu0 %v270, 8
      %v373 = vpop.permute.xlu0 %372
      %374 = vrot.lane.b32.xlu0 %v272, 8
      %v375 = vpop.permute.xlu0 %374
      %376 = vrot.lane.b32.xlu0 %v275, 8
      %v377 = vpop.permute.xlu0 %376
      %378 = vrot.lane.b32.xlu0 %v277, 8
      %v379 = vpop.permute.xlu0 %378
      %380 = vrot.lane.b32.xlu0 %v280, 8
      %v381 = vpop.permute.xlu0 %380
      %382 = vrot.lane.b32.xlu0 %v282, 8
      %v383 = vpop.permute.xlu0 %382
      %384 = vrot.lane.b32.xlu0 %v285, 8
      %v385 = vpop.permute.xlu0 %384
      %386 = vrot.lane.b32.xlu0 %v287, 8
      %v387 = vpop.permute.xlu0 %386
      %388 = vrot.lane.b32.xlu0 %v290, 8
      %v389 = vpop.permute.xlu0 %388
      %390 = vrot.lane.b32.xlu0 %v292, 8
      %v391 = vpop.permute.xlu0 %390
      %408 = vrot.lane.b32.xlu0 %v296, 16
      %v409 = vpop.permute.xlu0 %408
      %410 = vrot.lane.b32.xlu0 %v298, 16
      %v411 = vpop.permute.xlu0 %410
      %412 = vrot.lane.b32.xlu0 %v301, 16
      %v413 = vpop.permute.xlu0 %412
      %414 = vrot.lane.b32.xlu0 %v303, 16
      %v415 = vpop.permute.xlu0 %414
      %416 = vrot.lane.b32.xlu0 %v306, 16
      %v417 = vpop.permute.xlu0 %416
      %418 = vrot.lane.b32.xlu0 %v308, 16
      %v419 = vpop.permute.xlu0 %418
      %420 = vrot.lane.b32.xlu0 %v311, 16
      %v421 = vpop.permute.xlu0 %420
      %422 = vrot.lane.b32.xlu0 %v313, 16
      %v423 = vpop.permute.xlu0 %422
      %424 = vrot.lane.b32.xlu0 %v316, 16
      %v425 = vpop.permute.xlu0 %424
      %426 = vrot.lane.b32.xlu0 %v318, 16
      %v427 = vpop.permute.xlu0 %426
      %428 = vrot.lane.b32.xlu0 %v321, 16
      %v429 = vpop.permute.xlu0 %428
      %430 = vrot.lane.b32.xlu0 %v323, 16
      %v431 = vpop.permute.xlu0 %430
      %432 = vrot.lane.b32.xlu0 %v326, 16
      %v433 = vpop.permute.xlu0 %432
      %434 = vrot.lane.b32.xlu0 %v328, 16
      %v435 = vpop.permute.xlu0 %434
      %436 = vrot.lane.b32.xlu0 %v331, 16
      %v437 = vpop.permute.xlu0 %436
      %438 = vrot.lane.b32.xlu0 %v333, 16
      %v439 = vpop.permute.xlu0 %438
      %456 = vrot.lane.b32.xlu0 %v201, 24
      %v457 = vpop.permute.xlu0 %456
      %458 = vrot.lane.b32.xlu0 %v202, 24
      %v459 = vpop.permute.xlu0 %458
      %460 = vrot.lane.b32.xlu0 %v204, 24
      %v461 = vpop.permute.xlu0 %460
      %462 = vrot.lane.b32.xlu0 %v205, 24
      %v463 = vpop.permute.xlu0 %462
      %464 = vrot.lane.b32.xlu0 %v207, 24
      %v465 = vpop.permute.xlu0 %464
      %466 = vrot.lane.b32.xlu0 %v208, 24
      %v467 = vpop.permute.xlu0 %466
      %468 = vrot.lane.b32.xlu0 %v210, 24
      %v469 = vpop.permute.xlu0 %468
      %470 = vrot.lane.b32.xlu0 %v211, 24
      %v471 = vpop.permute.xlu0 %470
      %472 = vrot.lane.b32.xlu0 %v213, 24
      %v473 = vpop.permute.xlu0 %472
      %474 = vrot.lane.b32.xlu0 %v214, 24
      %v475 = vpop.permute.xlu0 %474
      %476 = vrot.lane.b32.xlu0 %v216, 24
      %v477 = vpop.permute.xlu0 %476
      %478 = vrot.lane.b32.xlu0 %v217, 24
      %v479 = vpop.permute.xlu0 %478
      %480 = vrot.lane.b32.xlu0 %v219, 24
      %v481 = vpop.permute.xlu0 %480
      %482 = vrot.lane.b32.xlu0 %v220, 24
      %v483 = vpop.permute.xlu0 %482
      %484 = vrot.lane.b32.xlu0 %v222, 24
      %v485 = vpop.permute.xlu0 %484
      %486 = vrot.lane.b32.xlu0 %v223, 24
      %v487 = vpop.permute.xlu0 %486
      %504 = vrot.lane.b32.xlu0 %v260, 32
      %v505 = vpop.permute.xlu0 %504
      %506 = vrot.lane.b32.xlu0 %v262, 32
      %v507 = vpop.permute.xlu0 %506
      %508 = vrot.lane.b32.xlu0 %v265, 32
      %v509 = vpop.permute.xlu0 %508
      %510 = vrot.lane.b32.xlu0 %v267, 32
      %v511 = vpop.permute.xlu0 %510
      %512 = vrot.lane.b32.xlu0 %v270, 32
      %v513 = vpop.permute.xlu0 %512
      %514 = vrot.lane.b32.xlu0 %v272, 32
      %v515 = vpop.permute.xlu0 %514
      %516 = vrot.lane.b32.xlu0 %v275, 32
      %v517 = vpop.permute.xlu0 %516
      %518 = vrot.lane.b32.xlu0 %v277, 32
      %v519 = vpop.permute.xlu0 %518
      %520 = vrot.lane.b32.xlu0 %v280, 32
      %v521 = vpop.permute.xlu0 %520
      %522 = vrot.lane.b32.xlu0 %v282, 32
      %v523 = vpop.permute.xlu0 %522
      %524 = vrot.lane.b32.xlu0 %v285, 32
      %v525 = vpop.permute.xlu0 %524
      %526 = vrot.lane.b32.xlu0 %v287, 32
      %v527 = vpop.permute.xlu0 %526
      %528 = vrot.lane.b32.xlu0 %v290, 32
      %v529 = vpop.permute.xlu0 %528
      %530 = vrot.lane.b32.xlu0 %v292, 32
      %v531 = vpop.permute.xlu0 %530
      %532 = vrot.lane.b32.xlu0 %v339, 32
      %v533 = vpop.permute.xlu0 %532
      %534 = vrot.lane.b32.xlu0 %v341, 32
      %v535 = vpop.permute.xlu0 %534
      %552 = vrot.lane.b32.xlu0 %v301, 40
      %v553 = vpop.permute.xlu0 %552
      %554 = vrot.lane.b32.xlu0 %v303, 40
      %v555 = vpop.permute.xlu0 %554
      %556 = vrot.lane.b32.xlu0 %v306, 40
      %v557 = vpop.permute.xlu0 %556
      %558 = vrot.lane.b32.xlu0 %v308, 40
      %v559 = vpop.permute.xlu0 %558
      %560 = vrot.lane.b32.xlu0 %v311, 40
      %v561 = vpop.permute.xlu0 %560
      %562 = vrot.lane.b32.xlu0 %v313, 40
      %v563 = vpop.permute.xlu0 %562
      %564 = vrot.lane.b32.xlu0 %v316, 40
      %v565 = vpop.permute.xlu0 %564
      %566 = vrot.lane.b32.xlu0 %v318, 40
      %v567 = vpop.permute.xlu0 %566
      %568 = vrot.lane.b32.xlu0 %v321, 40
      %v569 = vpop.permute.xlu0 %568
      %570 = vrot.lane.b32.xlu0 %v323, 40
      %v571 = vpop.permute.xlu0 %570
      %572 = vrot.lane.b32.xlu0 %v326, 40
      %v573 = vpop.permute.xlu0 %572
      %574 = vrot.lane.b32.xlu0 %v328, 40
      %v575 = vpop.permute.xlu0 %574
      %576 = vrot.lane.b32.xlu0 %v331, 40
      %v577 = vpop.permute.xlu0 %576
      %578 = vrot.lane.b32.xlu0 %v333, 40
      %v579 = vpop.permute.xlu0 %578
      %580 = vrot.lane.b32.xlu0 %v344, 40
      %v581 = vpop.permute.xlu0 %580
      %582 = vrot.lane.b32.xlu0 %v346, 40
      %v583 = vpop.permute.xlu0 %582
      %600 = vrot.lane.b32.xlu0 %v204, 48
      %v601 = vpop.permute.xlu0 %600
      %602 = vrot.lane.b32.xlu0 %v205, 48
      %v603 = vpop.permute.xlu0 %602
      %604 = vrot.lane.b32.xlu0 %v207, 48
      %v605 = vpop.permute.xlu0 %604
      %606 = vrot.lane.b32.xlu0 %v208, 48
      %v607 = vpop.permute.xlu0 %606
      %608 = vrot.lane.b32.xlu0 %v210, 48
      %v609 = vpop.permute.xlu0 %608
      %610 = vrot.lane.b32.xlu0 %v211, 48
      %v611 = vpop.permute.xlu0 %610
      %612 = vrot.lane.b32.xlu0 %v213, 48
      %v613 = vpop.permute.xlu0 %612
      %614 = vrot.lane.b32.xlu0 %v214, 48
      %v615 = vpop.permute.xlu0 %614
      %616 = vrot.lane.b32.xlu0 %v216, 48
      %v617 = vpop.permute.xlu0 %616
      %618 = vrot.lane.b32.xlu0 %v217, 48
      %v619 = vpop.permute.xlu0 %618
      %620 = vrot.lane.b32.xlu0 %v219, 48
      %v621 = vpop.permute.xlu0 %620
      %622 = vrot.lane.b32.xlu0 %v220, 48
      %v623 = vpop.permute.xlu0 %622
      %624 = vrot.lane.b32.xlu0 %v222, 48
      %v625 = vpop.permute.xlu0 %624
      %626 = vrot.lane.b32.xlu0 %v223, 48
      %v627 = vpop.permute.xlu0 %626
      %628 = vrot.lane.b32.xlu0 %v225, 48
      %v629 = vpop.permute.xlu0 %628
      %630 = vrot.lane.b32.xlu0 %v226, 48
      %v631 = vpop.permute.xlu0 %630
      %648 = vrot.lane.b32.xlu0 %v265, 56
      %v649 = vpop.permute.xlu0 %648
      %650 = vrot.lane.b32.xlu0 %v267, 56
      %v651 = vpop.permute.xlu0 %650
      %652 = vrot.lane.b32.xlu0 %v270, 56
      %v653 = vpop.permute.xlu0 %652
      %654 = vrot.lane.b32.xlu0 %v272, 56
      %v655 = vpop.permute.xlu0 %654
      %656 = vrot.lane.b32.xlu0 %v275, 56
      %v657 = vpop.permute.xlu0 %656
      %658 = vrot.lane.b32.xlu0 %v277, 56
      %v659 = vpop.permute.xlu0 %658
      %660 = vrot.lane.b32.xlu0 %v280, 56
      %v661 = vpop.permute.xlu0 %660
      %662 = vrot.lane.b32.xlu0 %v282, 56
      %v663 = vpop.permute.xlu0 %662
      %664 = vrot.lane.b32.xlu0 %v285, 56
      %v665 = vpop.permute.xlu0 %664
      %666 = vrot.lane.b32.xlu0 %v287, 56
      %v667 = vpop.permute.xlu0 %666
      %668 = vrot.lane.b32.xlu0 %v290, 56
      %v669 = vpop.permute.xlu0 %668
      %670 = vrot.lane.b32.xlu0 %v292, 56
      %v671 = vpop.permute.xlu0 %670
      %672 = vrot.lane.b32.xlu0 %v339, 56
      %v673 = vpop.permute.xlu0 %672
      %674 = vrot.lane.b32.xlu0 %v341, 56
      %v675 = vpop.permute.xlu0 %674
      %676 = vrot.lane.b32.xlu0 %v352, 56
      %v677 = vpop.permute.xlu0 %676
      %678 = vrot.lane.b32.xlu0 %v354, 56
      %v679 = vpop.permute.xlu0 %678
      %696 = vrot.lane.b32.xlu0 %v306, 64
      %v697 = vpop.permute.xlu0 %696
      %698 = vrot.lane.b32.xlu0 %v308, 64
      %v699 = vpop.permute.xlu0 %698
      %700 = vrot.lane.b32.xlu0 %v311, 64
      %v701 = vpop.permute.xlu0 %700
      %702 = vrot.lane.b32.xlu0 %v313, 64
      %v703 = vpop.permute.xlu0 %702
      %704 = vrot.lane.b32.xlu0 %v316, 64
      %v705 = vpop.permute.xlu0 %704
      %706 = vrot.lane.b32.xlu0 %v318, 64
      %v707 = vpop.permute.xlu0 %706
      %708 = vrot.lane.b32.xlu0 %v321, 64
      %v709 = vpop.permute.xlu0 %708
      %710 = vrot.lane.b32.xlu0 %v323, 64
      %v711 = vpop.permute.xlu0 %710
      %712 = vrot.lane.b32.xlu0 %v326, 64
      %v713 = vpop.permute.xlu0 %712
      %714 = vrot.lane.b32.xlu0 %v328, 64
      %v715 = vpop.permute.xlu0 %714
      %716 = vrot.lane.b32.xlu0 %v331, 64
      %v717 = vpop.permute.xlu0 %716
      %718 = vrot.lane.b32.xlu0 %v333, 64
      %v719 = vpop.permute.xlu0 %718
      %720 = vrot.lane.b32.xlu0 %v344, 64
      %v721 = vpop.permute.xlu0 %720
      %722 = vrot.lane.b32.xlu0 %v346, 64
      %v723 = vpop.permute.xlu0 %722
      %724 = vrot.lane.b32.xlu0 %v357, 64
      %v725 = vpop.permute.xlu0 %724
      %726 = vrot.lane.b32.xlu0 %v359, 64
      %v727 = vpop.permute.xlu0 %726
      %vm744 = vcmask 64512
      %v745 = vsel %vm744, %v198, %v361
      %v746 = vsel %vm744, %v199, %v363
      %v747 = vsel %vm744, %v201, %v365
      %v748 = vsel %vm744, %v202, %v367
      %v749 = vsel %vm744, %v204, %v369
      %v750 = vsel %vm744, %v205, %v371
      %v751 = vsel %vm744, %v207, %v373
      %v752 = vsel %vm744, %v208, %v375
      %v753 = vsel %vm744, %v210, %v377
      %v754 = vsel %vm744, %v211, %v379
      %v755 = vsel %vm744, %v213, %v381
      %v756 = vsel %vm744, %v214, %v383
      %v757 = vsel %vm744, %v216, %v385
      %v758 = vsel %vm744, %v217, %v387
      %v759 = vsel %vm744, %v219, %v389
      %v760 = vsel %vm744, %v220, %v391
      %vm761 = vcmask 130048
      %v762 = vsel %vm761, %v745, %v409
      %v763 = vsel %vm761, %v746, %v411
      %v764 = vsel %vm761, %v747, %v413
      %v765 = vsel %vm761, %v748, %v415
      %v766 = vsel %vm761, %v749, %v417
      %v767 = vsel %vm761, %v750, %v419
      %v768 = vsel %vm761, %v751, %v421
      %v769 = vsel %vm761, %v752, %v423
      %v770 = vsel %vm761, %v753, %v425
      %v771 = vsel %vm761, %v754, %v427
      %v772 = vsel %vm761, %v755, %v429
      %v773 = vsel %vm761, %v756, %v431
      %v774 = vsel %vm761, %v757, %v433
      %v775 = vsel %vm761, %v758, %v435
      %v776 = vsel %vm761, %v759, %v437
      %v777 = vsel %vm761, %v760, %v439
      %vm778 = vcmask 195584
      %v779 = vsel %vm778, %v762, %v457
      %v780 = vsel %vm778, %v763, %v459
      %v781 = vsel %vm778, %v764, %v461
      %v782 = vsel %vm778, %v765, %v463
      %v783 = vsel %vm778, %v766, %v465
      %v784 = vsel %vm778, %v767, %v467
      %v785 = vsel %vm778, %v768, %v469
      %v786 = vsel %vm778, %v769, %v471
      %v787 = vsel %vm778, %v770, %v473
      %v788 = vsel %vm778, %v771, %v475
      %v789 = vsel %vm778, %v772, %v477
      %v790 = vsel %vm778, %v773, %v479
      %v791 = vsel %vm778, %v774, %v481
      %v792 = vsel %vm778, %v775, %v483
      %v793 = vsel %vm778, %v776, %v485
      %v794 = vsel %vm778, %v777, %v487
      %vm795 = vcmask 261120
      %v796 = vsel %vm795, %v779, %v505
      %v797 = vsel %vm795, %v780, %v507
      %v798 = vsel %vm795, %v781, %v509
      %v799 = vsel %vm795, %v782, %v511
      %v800 = vsel %vm795, %v783, %v513
      %v801 = vsel %vm795, %v784, %v515
      %v802 = vsel %vm795, %v785, %v517
      %v803 = vsel %vm795, %v786, %v519
      %v804 = vsel %vm795, %v787, %v521
      %v805 = vsel %vm795, %v788, %v523
      %v806 = vsel %vm795, %v789, %v525
      %v807 = vsel %vm795, %v790, %v527
      %v808 = vsel %vm795, %v791, %v529
      %v809 = vsel %vm795, %v792, %v531
      %v810 = vsel %vm795, %v793, %v533
      %v811 = vsel %vm795, %v794, %v535
      %vm812 = vcmask 326656
      %v813 = vsel %vm812, %v796, %v553
      %v814 = vsel %vm812, %v797, %v555
      %v815 = vsel %vm812, %v798, %v557
      %v816 = vsel %vm812, %v799, %v559
      %v817 = vsel %vm812, %v800, %v561
      %v818 = vsel %vm812, %v801, %v563
      %v819 = vsel %vm812, %v802, %v565
      %v820 = vsel %vm812, %v803, %v567
      %v821 = vsel %vm812, %v804, %v569
      %v822 = vsel %vm812, %v805, %v571
      %v823 = vsel %vm812, %v806, %v573
      %v824 = vsel %vm812, %v807, %v575
      %v825 = vsel %vm812, %v808, %v577
      %v826 = vsel %vm812, %v809, %v579
      %v827 = vsel %vm812, %v810, %v581
      %v828 = vsel %vm812, %v811, %v583
      %vm829 = vcmask 392192
      %v830 = vsel %vm829, %v813, %v601
      %v831 = vsel %vm829, %v814, %v603
      %v832 = vsel %vm829, %v815, %v605
      %v833 = vsel %vm829, %v816, %v607
      %v834 = vsel %vm829, %v817, %v609
      %v835 = vsel %vm829, %v818, %v611
      %v836 = vsel %vm829, %v819, %v613
      %v837 = vsel %vm829, %v820, %v615
      %v838 = vsel %vm829, %v821, %v617
      %v839 = vsel %vm829, %v822, %v619
      %v840 = vsel %vm829, %v823, %v621
      %v841 = vsel %vm829, %v824, %v623
      %v842 = vsel %vm829, %v825, %v625
      %v843 = vsel %vm829, %v826, %v627
      %v844 = vsel %vm829, %v827, %v629
      %v845 = vsel %vm829, %v828, %v631
      %vm846 = vcmask 457728
      %v847 = vsel %vm846, %v830, %v649
      %v848 = vsel %vm846, %v831, %v651
      %v849 = vsel %vm846, %v832, %v653
      %v850 = vsel %vm846, %v833, %v655
      %v851 = vsel %vm846, %v834, %v657
      %v852 = vsel %vm846, %v835, %v659
      %v853 = vsel %vm846, %v836, %v661
      %v854 = vsel %vm846, %v837, %v663
      %v855 = vsel %vm846, %v838, %v665
      %v856 = vsel %vm846, %v839, %v667
      %v857 = vsel %vm846, %v840, %v669
      %v858 = vsel %vm846, %v841, %v671
      %v859 = vsel %vm846, %v842, %v673
      %v860 = vsel %vm846, %v843, %v675
      %v861 = vsel %vm846, %v844, %v677
      %v862 = vsel %vm846, %v845, %v679
      %vm863 = vcmask 523264
      %v864 = vsel %vm863, %v847, %v697
      %v865 = vsel %vm863, %v848, %v699
      %v866 = vsel %vm863, %v849, %v701
      %v867 = vsel %vm863, %v850, %v703
      %v868 = vsel %vm863, %v851, %v705
      %v869 = vsel %vm863, %v852, %v707
      %v870 = vsel %vm863, %v853, %v709
      %v871 = vsel %vm863, %v854, %v711
      %v872 = vsel %vm863, %v855, %v713
      %v873 = vsel %vm863, %v856, %v715
      %v874 = vsel %vm863, %v857, %v717
      %v875 = vsel %vm863, %v858, %v719
      %v876 = vsel %vm863, %v859, %v721
      %v877 = vsel %vm863, %v860, %v723
      %v878 = vsel %vm863, %v861, %v725
      %v879 = vsel %vm863, %v862, %v727
      %v880 = vld [vmem:[%s1] sm:$0xff]
      %v881 = vld [vmem:[%s1 + $0x8] sm:$0xff]
      %v882 = vld [vmem:[%s1 + $0x10] sm:$0xff]
      %v883 = vld [vmem:[%s1 + $0x18] sm:$0xff]
      %v884 = vld [vmem:[%s1 + $0x20] sm:$0xff]
      %v885 = vld [vmem:[%s1 + $0x28] sm:$0xff]
      %v886 = vld [vmem:[%s1 + $0x30] sm:$0xff]
      %v887 = vld [vmem:[%s1 + $0x38] sm:$0xff]
      %v888 = vld [vmem:[%s1 + $0x40] sm:$0xff]
      %vm889 = vcmask 588800
      %v891 = vsel %vm889, %v864, 0
      %v894 = vsel %vm889, %v865, 0
      %v897 = vsel %vm889, %v866, 0
      %v900 = vsel %vm889, %v867, 0
      %v903 = vsel %vm889, %v868, 0
      %v906 = vsel %vm889, %v869, 0
      %v909 = vsel %vm889, %v870, 0
      %v912 = vsel %vm889, %v871, 0
      %v915 = vsel %vm889, %v872, 0
      %v918 = vsel %vm889, %v873, 0
      %v921 = vsel %vm889, %v874, 0
      %v924 = vsel %vm889, %v875, 0
      %v927 = vsel %vm889, %v876, 0
      %v930 = vsel %vm889, %v877, 0
      %v933 = vsel %vm889, %v878, 0
      %v936 = vsel %vm889, %v879, 0
      %938 = vmatpush.msra.mxu0 0.0
      %939 = vmatpush.msra.mxu0 0.0
      %940 = vmatpush.msra.mxu0 0.0
      %941 = vmatpush.msra.mxu0 0.0
      %942 = vmatpush.msra.mxu0 0.0
      %943 = vmatpush.msra.mxu0 0.0
      %944 = vmatpush.msra.mxu0 0.0
      %v945 = vand.u32 %v888, 4294901760
      %946 = vmatpush.msra.mxu0 %v945
      %v947 = vand.u32 %v887, 4294901760
      %948 = vmatpush.msra.mxu0 %v947
      %v949 = vand.u32 %v886, 4294901760
      %950 = vmatpush.msra.mxu0 %v949
      %v951 = vand.u32 %v885, 4294901760
      %952 = vmatpush.msra.mxu0 %v951
      %v953 = vand.u32 %v884, 4294901760
      %954 = vmatpush.msra.mxu0 %v953
      %v955 = vand.u32 %v883, 4294901760
      %956 = vmatpush.msra.mxu0 %v955
      %v957 = vand.u32 %v882, 4294901760
      %958 = vmatpush.msra.mxu0 %v957
      %v959 = vand.u32 %v881, 4294901760
      %960 = vmatpush.msra.mxu0 %v959
      %v961 = vand.u32 %v880, 4294901760
      %962 = vmatpush.msra.mxu0 %v961
      %v963 = vand.u32 %v891, 4294901760
      %v964 = vsub.f32 %v891, %v963
      %v965 = vand.u32 %v964, 4294901760
      %v966 = vsub.f32 %v964, %v965
      %v967 = vand.u32 %v966, 4294901760
      %968 = vmatmul.f32.gmra.mxu0 %v967
      %v969 = vpop.f32.mrf.mxu0
      %v970 = vadd.f32 0.0, %v969
      %v971 = vand.u32 %v894, 4294901760
      %v972 = vsub.f32 %v894, %v971
      %v973 = vand.u32 %v972, 4294901760
      %v974 = vsub.f32 %v972, %v973
      %v975 = vand.u32 %v974, 4294901760
      %976 = vmatmul.f32.gmra.mxu0 %v975
      %v977 = vpop.f32.mrf.mxu0
      %v978 = vadd.f32 0.0, %v977
      %v979 = vand.u32 %v897, 4294901760
      %v980 = vsub.f32 %v897, %v979
      %v981 = vand.u32 %v980, 4294901760
      %v982 = vsub.f32 %v980, %v981
      %v983 = vand.u32 %v982, 4294901760
      %984 = vmatmul.f32.gmra.mxu0 %v983
      %v985 = vpop.f32.mrf.mxu0
      %v986 = vadd.f32 0.0, %v985
      %v987 = vand.u32 %v900, 4294901760
      %v988 = vsub.f32 %v900, %v987
      %v989 = vand.u32 %v988, 4294901760
      %v990 = vsub.f32 %v988, %v989
      %v991 = vand.u32 %v990, 4294901760
      %992 = vmatmul.f32.gmra.mxu0 %v991
      %v993 = vpop.f32.mrf.mxu0
      %v994 = vadd.f32 0.0, %v993
      %v995 = vand.u32 %v903, 4294901760
      %v996 = vsub.f32 %v903, %v995
      %v997 = vand.u32 %v996, 4294901760
      %v998 = vsub.f32 %v996, %v997
      %v999 = vand.u32 %v998, 4294901760
      %1000 = vmatmul.f32.gmra.mxu0 %v999
      %v1001 = vpop.f32.mrf.mxu0
      %v1002 = vadd.f32 0.0, %v1001
      %v1003 = vand.u32 %v906, 4294901760
      %v1004 = vsub.f32 %v906, %v1003
      %v1005 = vand.u32 %v1004, 4294901760
      %v1006 = vsub.f32 %v1004, %v1005
      %v1007 = vand.u32 %v1006, 4294901760
      %1008 = vmatmul.f32.gmra.mxu0 %v1007
      %v1009 = vpop.f32.mrf.mxu0
      %v1010 = vadd.f32 0.0, %v1009
      %v1011 = vand.u32 %v909, 4294901760
      %v1012 = vsub.f32 %v909, %v1011
      %v1013 = vand.u32 %v1012, 4294901760
      %v1014 = vsub.f32 %v1012, %v1013
      %v1015 = vand.u32 %v1014, 4294901760
      %1016 = vmatmul.f32.gmra.mxu0 %v1015
      %v1017 = vpop.f32.mrf.mxu0
      %v1018 = vadd.f32 0.0, %v1017
      %v1019 = vand.u32 %v912, 4294901760
      %v1020 = vsub.f32 %v912, %v1019
      %v1021 = vand.u32 %v1020, 4294901760
      %v1022 = vsub.f32 %v1020, %v1021
      %v1023 = vand.u32 %v1022, 4294901760
      %1024 = vmatmul.f32.gmra.mxu0 %v1023
      %v1025 = vpop.f32.mrf.mxu0
      %v1026 = vadd.f32 0.0, %v1025
      %v1027 = vand.u32 %v915, 4294901760
      %v1028 = vsub.f32 %v915, %v1027
      %v1029 = vand.u32 %v1028, 4294901760
      %v1030 = vsub.f32 %v1028, %v1029
      %v1031 = vand.u32 %v1030, 4294901760
      %1032 = vmatmul.f32.gmra.mxu0 %v1031
      %v1033 = vpop.f32.mrf.mxu0
      %v1034 = vadd.f32 0.0, %v1033
      %v1035 = vand.u32 %v918, 4294901760
      %v1036 = vsub.f32 %v918, %v1035
      %v1037 = vand.u32 %v1036, 4294901760
      %v1038 = vsub.f32 %v1036, %v1037
      %v1039 = vand.u32 %v1038, 4294901760
      %1040 = vmatmul.f32.gmra.mxu0 %v1039
      %v1041 = vpop.f32.mrf.mxu0
      %v1042 = vadd.f32 0.0, %v1041
      %v1043 = vand.u32 %v921, 4294901760
      %v1044 = vsub.f32 %v921, %v1043
      %v1045 = vand.u32 %v1044, 4294901760
      %v1046 = vsub.f32 %v1044, %v1045
      %v1047 = vand.u32 %v1046, 4294901760
      %1048 = vmatmul.f32.gmra.mxu0 %v1047
      %v1049 = vpop.f32.mrf.mxu0
      %v1050 = vadd.f32 0.0, %v1049
      %v1051 = vand.u32 %v924, 4294901760
      %v1052 = vsub.f32 %v924, %v1051
      %v1053 = vand.u32 %v1052, 4294901760
      %v1054 = vsub.f32 %v1052, %v1053
      %v1055 = vand.u32 %v1054, 4294901760
      %1056 = vmatmul.f32.gmra.mxu0 %v1055
      %v1057 = vpop.f32.mrf.mxu0
      %v1058 = vadd.f32 0.0, %v1057
      %v1059 = vand.u32 %v927, 4294901760
      %v1060 = vsub.f32 %v927, %v1059
      %v1061 = vand.u32 %v1060, 4294901760
      %v1062 = vsub.f32 %v1060, %v1061
      %v1063 = vand.u32 %v1062, 4294901760
      %1064 = vmatmul.f32.gmra.mxu0 %v1063
      %v1065 = vpop.f32.mrf.mxu0
      %v1066 = vadd.f32 0.0, %v1065
      %v1067 = vand.u32 %v930, 4294901760
      %v1068 = vsub.f32 %v930, %v1067
      %v1069 = vand.u32 %v1068, 4294901760
      %v1070 = vsub.f32 %v1068, %v1069
      %v1071 = vand.u32 %v1070, 4294901760
      %1072 = vmatmul.f32.gmra.mxu0 %v1071
      %v1073 = vpop.f32.mrf.mxu0
      %v1074 = vadd.f32 0.0, %v1073
      %v1075 = vand.u32 %v933, 4294901760
      %v1076 = vsub.f32 %v933, %v1075
      %v1077 = vand.u32 %v1076, 4294901760
      %v1078 = vsub.f32 %v1076, %v1077
      %v1079 = vand.u32 %v1078, 4294901760
      %1080 = vmatmul.f32.gmra.mxu0 %v1079
      %v1081 = vpop.f32.mrf.mxu0
      %v1082 = vadd.f32 0.0, %v1081
      %v1083 = vand.u32 %v936, 4294901760
      %v1084 = vsub.f32 %v936, %v1083
      %v1085 = vand.u32 %v1084, 4294901760
      %v1086 = vsub.f32 %v1084, %v1085
      %v1087 = vand.u32 %v1086, 4294901760
      %1088 = vmatmul.f32.gmra.mxu0 %v1087
      %v1089 = vpop.f32.mrf.mxu0
      %v1090 = vadd.f32 0.0, %v1089
      %1091 = vdwg.mxu0
      %1092 = vmatpush.msra.mxu0 0.0
      %1093 = vmatpush.msra.mxu0 0.0
      %1094 = vmatpush.msra.mxu0 0.0
      %1095 = vmatpush.msra.mxu0 0.0
      %1096 = vmatpush.msra.mxu0 0.0
      %1097 = vmatpush.msra.mxu0 0.0
      %1098 = vmatpush.msra.mxu0 0.0
      %v1099 = vand.u32 %v888, 4294901760
      %v1100 = vsub.f32 %v888, %v1099
      %v1101 = vand.u32 %v1100, 4294901760
      %v1102 = vsub.f32 %v1100, %v1101
      %v1103 = vand.u32 %v1102, 4294901760
      %1104 = vmatpush.msra.mxu0 %v1103
      %v1105 = vand.u32 %v887, 4294901760
      %v1106 = vsub.f32 %v887, %v1105
      %v1107 = vand.u32 %v1106, 4294901760
      %v1108 = vsub.f32 %v1106, %v1107
      %v1109 = vand.u32 %v1108, 4294901760
      %1110 = vmatpush.msra.mxu0 %v1109
      %v1111 = vand.u32 %v886, 4294901760
      %v1112 = vsub.f32 %v886, %v1111
      %v1113 = vand.u32 %v1112, 4294901760
      %v1114 = vsub.f32 %v1112, %v1113
      %v1115 = vand.u32 %v1114, 4294901760
      %1116 = vmatpush.msra.mxu0 %v1115
      %v1117 = vand.u32 %v885, 4294901760
      %v1118 = vsub.f32 %v885, %v1117
      %v1119 = vand.u32 %v1118, 4294901760
      %v1120 = vsub.f32 %v1118, %v1119
      %v1121 = vand.u32 %v1120, 4294901760
      %1122 = vmatpush.msra.mxu0 %v1121
      %v1123 = vand.u32 %v884, 4294901760
      %v1124 = vsub.f32 %v884, %v1123
      %v1125 = vand.u32 %v1124, 4294901760
      %v1126 = vsub.f32 %v1124, %v1125
      %v1127 = vand.u32 %v1126, 4294901760
      %1128 = vmatpush.msra.mxu0 %v1127
      %v1129 = vand.u32 %v883, 4294901760
      %v1130 = vsub.f32 %v883, %v1129
      %v1131 = vand.u32 %v1130, 4294901760
      %v1132 = vsub.f32 %v1130, %v1131
      %v1133 = vand.u32 %v1132, 4294901760
      %1134 = vmatpush.msra.mxu0 %v1133
      %v1135 = vand.u32 %v882, 4294901760
      %v1136 = vsub.f32 %v882, %v1135
      %v1137 = vand.u32 %v1136, 4294901760
      %v1138 = vsub.f32 %v1136, %v1137
      %v1139 = vand.u32 %v1138, 4294901760
      %1140 = vmatpush.msra.mxu0 %v1139
      %v1141 = vand.u32 %v881, 4294901760
      %v1142 = vsub.f32 %v881, %v1141
      %v1143 = vand.u32 %v1142, 4294901760
      %v1144 = vsub.f32 %v1142, %v1143
      %v1145 = vand.u32 %v1144, 4294901760
      %1146 = vmatpush.msra.mxu0 %v1145
      %v1147 = vand.u32 %v880, 4294901760
      %v1148 = vsub.f32 %v880, %v1147
      %v1149 = vand.u32 %v1148, 4294901760
      %v1150 = vsub.f32 %v1148, %v1149
      %v1151 = vand.u32 %v1150, 4294901760
      %1152 = vmatpush.msra.mxu0 %v1151
      %v1153 = vand.u32 %v891, 4294901760
      %1154 = vmatmul.f32.gmra.mxu0 %v1153
      %v1155 = vpop.f32.mrf.mxu0
      %v1156 = vadd.f32 %v970, %v1155
      %v1157 = vand.u32 %v894, 4294901760
      %1158 = vmatmul.f32.gmra.mxu0 %v1157
      %v1159 = vpop.f32.mrf.mxu0
      %v1160 = vadd.f32 %v978, %v1159
      %v1161 = vand.u32 %v897, 4294901760
      %1162 = vmatmul.f32.gmra.mxu0 %v1161
      %v1163 = vpop.f32.mrf.mxu0
      %v1164 = vadd.f32 %v986, %v1163
      %v1165 = vand.u32 %v900, 4294901760
      %1166 = vmatmul.f32.gmra.mxu0 %v1165
      %v1167 = vpop.f32.mrf.mxu0
      %v1168 = vadd.f32 %v994, %v1167
      %v1169 = vand.u32 %v903, 4294901760
      %1170 = vmatmul.f32.gmra.mxu0 %v1169
      %v1171 = vpop.f32.mrf.mxu0
      %v1172 = vadd.f32 %v1002, %v1171
      %v1173 = vand.u32 %v906, 4294901760
      %1174 = vmatmul.f32.gmra.mxu0 %v1173
      %v1175 = vpop.f32.mrf.mxu0
      %v1176 = vadd.f32 %v1010, %v1175
      %v1177 = vand.u32 %v909, 4294901760
      %1178 = vmatmul.f32.gmra.mxu0 %v1177
      %v1179 = vpop.f32.mrf.mxu0
      %v1180 = vadd.f32 %v1018, %v1179
      %v1181 = vand.u32 %v912, 4294901760
      %1182 = vmatmul.f32.gmra.mxu0 %v1181
      %v1183 = vpop.f32.mrf.mxu0
      %v1184 = vadd.f32 %v1026, %v1183
      %v1185 = vand.u32 %v915, 4294901760
      %1186 = vmatmul.f32.gmra.mxu0 %v1185
      %v1187 = vpop.f32.mrf.mxu0
      %v1188 = vadd.f32 %v1034, %v1187
      %v1189 = vand.u32 %v918, 4294901760
      %1190 = vmatmul.f32.gmra.mxu0 %v1189
      %v1191 = vpop.f32.mrf.mxu0
      %v1192 = vadd.f32 %v1042, %v1191
      %v1193 = vand.u32 %v921, 4294901760
      %1194 = vmatmul.f32.gmra.mxu0 %v1193
      %v1195 = vpop.f32.mrf.mxu0
      %v1196 = vadd.f32 %v1050, %v1195
      %v1197 = vand.u32 %v924, 4294901760
      %1198 = vmatmul.f32.gmra.mxu0 %v1197
      %v1199 = vpop.f32.mrf.mxu0
      %v1200 = vadd.f32 %v1058, %v1199
      %v1201 = vand.u32 %v927, 4294901760
      %1202 = vmatmul.f32.gmra.mxu0 %v1201
      %v1203 = vpop.f32.mrf.mxu0
      %v1204 = vadd.f32 %v1066, %v1203
      %v1205 = vand.u32 %v930, 4294901760
      %1206 = vmatmul.f32.gmra.mxu0 %v1205
      %v1207 = vpop.f32.mrf.mxu0
      %v1208 = vadd.f32 %v1074, %v1207
      %v1209 = vand.u32 %v933, 4294901760
      %1210 = vmatmul.f32.gmra.mxu0 %v1209
      %v1211 = vpop.f32.mrf.mxu0
      %v1212 = vadd.f32 %v1082, %v1211
      %v1213 = vand.u32 %v936, 4294901760
      %1214 = vmatmul.f32.gmra.mxu0 %v1213
      %v1215 = vpop.f32.mrf.mxu0
      %v1216 = vadd.f32 %v1090, %v1215
      %1217 = vdwg.mxu0
      %1218 = vmatpush.msra.mxu0 0.0
      %1219 = vmatpush.msra.mxu0 0.0
      %1220 = vmatpush.msra.mxu0 0.0
      %1221 = vmatpush.msra.mxu0 0.0
      %1222 = vmatpush.msra.mxu0 0.0
      %1223 = vmatpush.msra.mxu0 0.0
      %1224 = vmatpush.msra.mxu0 0.0
      %v1225 = vand.u32 %v888, 4294901760
      %v1226 = vsub.f32 %v888, %v1225
      %1227 = vmatpush.msra.mxu0 %v1226
      %v1228 = vand.u32 %v887, 4294901760
      %v1229 = vsub.f32 %v887, %v1228
      %1230 = vmatpush.msra.mxu0 %v1229
      %v1231 = vand.u32 %v886, 4294901760
      %v1232 = vsub.f32 %v886, %v1231
      %1233 = vmatpush.msra.mxu0 %v1232
      %v1234 = vand.u32 %v885, 4294901760
      %v1235 = vsub.f32 %v885, %v1234
      %1236 = vmatpush.msra.mxu0 %v1235
      %v1237 = vand.u32 %v884, 4294901760
      %v1238 = vsub.f32 %v884, %v1237
      %1239 = vmatpush.msra.mxu0 %v1238
      %v1240 = vand.u32 %v883, 4294901760
      %v1241 = vsub.f32 %v883, %v1240
      %1242 = vmatpush.msra.mxu0 %v1241
      %v1243 = vand.u32 %v882, 4294901760
      %v1244 = vsub.f32 %v882, %v1243
      %1245 = vmatpush.msra.mxu0 %v1244
      %v1246 = vand.u32 %v881, 4294901760
      %v1247 = vsub.f32 %v881, %v1246
      %1248 = vmatpush.msra.mxu0 %v1247
      %v1249 = vand.u32 %v880, 4294901760
      %v1250 = vsub.f32 %v880, %v1249
      %1251 = vmatpush.msra.mxu0 %v1250
      %v1252 = vand.u32 %v891, 4294901760
      %v1253 = vsub.f32 %v891, %v1252
      %1254 = vmatmul.f32.gmra.mxu0 %v1253
      %v1255 = vpop.f32.mrf.mxu0
      %v1256 = vadd.f32 %v1156, %v1255
      %v1257 = vand.u32 %v894, 4294901760
      %v1258 = vsub.f32 %v894, %v1257
      %1259 = vmatmul.f32.gmra.mxu0 %v1258
      %v1260 = vpop.f32.mrf.mxu0
      %v1261 = vadd.f32 %v1160, %v1260
      %v1262 = vand.u32 %v897, 4294901760
      %v1263 = vsub.f32 %v897, %v1262
      %1264 = vmatmul.f32.gmra.mxu0 %v1263
      %v1265 = vpop.f32.mrf.mxu0
      %v1266 = vadd.f32 %v1164, %v1265
      %v1267 = vand.u32 %v900, 4294901760
      %v1268 = vsub.f32 %v900, %v1267
      %1269 = vmatmul.f32.gmra.mxu0 %v1268
      %v1270 = vpop.f32.mrf.mxu0
      %v1271 = vadd.f32 %v1168, %v1270
      %v1272 = vand.u32 %v903, 4294901760
      %v1273 = vsub.f32 %v903, %v1272
      %1274 = vmatmul.f32.gmra.mxu0 %v1273
      %v1275 = vpop.f32.mrf.mxu0
      %v1276 = vadd.f32 %v1172, %v1275
      %v1277 = vand.u32 %v906, 4294901760
      %v1278 = vsub.f32 %v906, %v1277
      %1279 = vmatmul.f32.gmra.mxu0 %v1278
      %v1280 = vpop.f32.mrf.mxu0
      %v1281 = vadd.f32 %v1176, %v1280
      %v1282 = vand.u32 %v909, 4294901760
      %v1283 = vsub.f32 %v909, %v1282
      %1284 = vmatmul.f32.gmra.mxu0 %v1283
      %v1285 = vpop.f32.mrf.mxu0
      %v1286 = vadd.f32 %v1180, %v1285
      %v1287 = vand.u32 %v912, 4294901760
      %v1288 = vsub.f32 %v912, %v1287
      %1289 = vmatmul.f32.gmra.mxu0 %v1288
      %v1290 = vpop.f32.mrf.mxu0
      %v1291 = vadd.f32 %v1184, %v1290
      %v1292 = vand.u32 %v915, 4294901760
      %v1293 = vsub.f32 %v915, %v1292
      %1294 = vmatmul.f32.gmra.mxu0 %v1293
      %v1295 = vpop.f32.mrf.mxu0
      %v1296 = vadd.f32 %v1188, %v1295
      %v1297 = vand.u32 %v918, 4294901760
      %v1298 = vsub.f32 %v918, %v1297
      %1299 = vmatmul.f32.gmra.mxu0 %v1298
      %v1300 = vpop.f32.mrf.mxu0
      %v1301 = vadd.f32 %v1192, %v1300
      %v1302 = vand.u32 %v921, 4294901760
      %v1303 = vsub.f32 %v921, %v1302
      %1304 = vmatmul.f32.gmra.mxu0 %v1303
      %v1305 = vpop.f32.mrf.mxu0
      %v1306 = vadd.f32 %v1196, %v1305
      %v1307 = vand.u32 %v924, 4294901760
      %v1308 = vsub.f32 %v924, %v1307
      %1309 = vmatmul.f32.gmra.mxu0 %v1308
      %v1310 = vpop.f32.mrf.mxu0
      %v1311 = vadd.f32 %v1200, %v1310
      %v1312 = vand.u32 %v927, 4294901760
      %v1313 = vsub.f32 %v927, %v1312
      %1314 = vmatmul.f32.gmra.mxu0 %v1313
      %v1315 = vpop.f32.mrf.mxu0
      %v1316 = vadd.f32 %v1204, %v1315
      %v1317 = vand.u32 %v930, 4294901760
      %v1318 = vsub.f32 %v930, %v1317
      %1319 = vmatmul.f32.gmra.mxu0 %v1318
      %v1320 = vpop.f32.mrf.mxu0
      %v1321 = vadd.f32 %v1208, %v1320
      %v1322 = vand.u32 %v933, 4294901760
      %v1323 = vsub.f32 %v933, %v1322
      %1324 = vmatmul.f32.gmra.mxu0 %v1323
      %v1325 = vpop.f32.mrf.mxu0
      %v1326 = vadd.f32 %v1212, %v1325
      %v1327 = vand.u32 %v936, 4294901760
      %v1328 = vsub.f32 %v936, %v1327
      %1329 = vmatmul.f32.gmra.mxu0 %v1328
      %v1330 = vpop.f32.mrf.mxu0
      %v1331 = vadd.f32 %v1216, %v1330
      %1332 = vdwg.mxu0
      %1333 = vmatpush.msra.mxu0 0.0
      %1334 = vmatpush.msra.mxu0 0.0
      %1335 = vmatpush.msra.mxu0 0.0
      %1336 = vmatpush.msra.mxu0 0.0
      %1337 = vmatpush.msra.mxu0 0.0
      %1338 = vmatpush.msra.mxu0 0.0
      %1339 = vmatpush.msra.mxu0 0.0
      %v1340 = vand.u32 %v888, 4294901760
      %1341 = vmatpush.msra.mxu0 %v1340
      %v1342 = vand.u32 %v887, 4294901760
      %1343 = vmatpush.msra.mxu0 %v1342
      %v1344 = vand.u32 %v886, 4294901760
      %1345 = vmatpush.msra.mxu0 %v1344
      %v1346 = vand.u32 %v885, 4294901760
      %1347 = vmatpush.msra.mxu0 %v1346
      %v1348 = vand.u32 %v884, 4294901760
      %1349 = vmatpush.msra.mxu0 %v1348
      %v1350 = vand.u32 %v883, 4294901760
      %1351 = vmatpush.msra.mxu0 %v1350
      %v1352 = vand.u32 %v882, 4294901760
      %1353 = vmatpush.msra.mxu0 %v1352
      %v1354 = vand.u32 %v881, 4294901760
      %1355 = vmatpush.msra.mxu0 %v1354
      %v1356 = vand.u32 %v880, 4294901760
      %1357 = vmatpush.msra.mxu0 %v1356
      %v1358 = vand.u32 %v891, 4294901760
      %v1359 = vsub.f32 %v891, %v1358
      %v1360 = vand.u32 %v1359, 4294901760
      %1361 = vmatmul.f32.gmra.mxu0 %v1360
      %v1362 = vpop.f32.mrf.mxu0
      %v1363 = vadd.f32 %v1256, %v1362
      %v1364 = vand.u32 %v894, 4294901760
      %v1365 = vsub.f32 %v894, %v1364
      %v1366 = vand.u32 %v1365, 4294901760
      %1367 = vmatmul.f32.gmra.mxu0 %v1366
      %v1368 = vpop.f32.mrf.mxu0
      %v1369 = vadd.f32 %v1261, %v1368
      %v1370 = vand.u32 %v897, 4294901760
      %v1371 = vsub.f32 %v897, %v1370
      %v1372 = vand.u32 %v1371, 4294901760
      %1373 = vmatmul.f32.gmra.mxu0 %v1372
      %v1374 = vpop.f32.mrf.mxu0
      %v1375 = vadd.f32 %v1266, %v1374
      %v1376 = vand.u32 %v900, 4294901760
      %v1377 = vsub.f32 %v900, %v1376
      %v1378 = vand.u32 %v1377, 4294901760
      %1379 = vmatmul.f32.gmra.mxu0 %v1378
      %v1380 = vpop.f32.mrf.mxu0
      %v1381 = vadd.f32 %v1271, %v1380
      %v1382 = vand.u32 %v903, 4294901760
      %v1383 = vsub.f32 %v903, %v1382
      %v1384 = vand.u32 %v1383, 4294901760
      %1385 = vmatmul.f32.gmra.mxu0 %v1384
      %v1386 = vpop.f32.mrf.mxu0
      %v1387 = vadd.f32 %v1276, %v1386
      %v1388 = vand.u32 %v906, 4294901760
      %v1389 = vsub.f32 %v906, %v1388
      %v1390 = vand.u32 %v1389, 4294901760
      %1391 = vmatmul.f32.gmra.mxu0 %v1390
      %v1392 = vpop.f32.mrf.mxu0
      %v1393 = vadd.f32 %v1281, %v1392
      %v1394 = vand.u32 %v909, 4294901760
      %v1395 = vsub.f32 %v909, %v1394
      %v1396 = vand.u32 %v1395, 4294901760
      %1397 = vmatmul.f32.gmra.mxu0 %v1396
      %v1398 = vpop.f32.mrf.mxu0
      %v1399 = vadd.f32 %v1286, %v1398
      %v1400 = vand.u32 %v912, 4294901760
      %v1401 = vsub.f32 %v912, %v1400
      %v1402 = vand.u32 %v1401, 4294901760
      %1403 = vmatmul.f32.gmra.mxu0 %v1402
      %v1404 = vpop.f32.mrf.mxu0
      %v1405 = vadd.f32 %v1291, %v1404
      %v1406 = vand.u32 %v915, 4294901760
      %v1407 = vsub.f32 %v915, %v1406
      %v1408 = vand.u32 %v1407, 4294901760
      %1409 = vmatmul.f32.gmra.mxu0 %v1408
      %v1410 = vpop.f32.mrf.mxu0
      %v1411 = vadd.f32 %v1296, %v1410
      %v1412 = vand.u32 %v918, 4294901760
      %v1413 = vsub.f32 %v918, %v1412
      %v1414 = vand.u32 %v1413, 4294901760
      %1415 = vmatmul.f32.gmra.mxu0 %v1414
      %v1416 = vpop.f32.mrf.mxu0
      %v1417 = vadd.f32 %v1301, %v1416
      %v1418 = vand.u32 %v921, 4294901760
      %v1419 = vsub.f32 %v921, %v1418
      %v1420 = vand.u32 %v1419, 4294901760
      %1421 = vmatmul.f32.gmra.mxu0 %v1420
      %v1422 = vpop.f32.mrf.mxu0
      %v1423 = vadd.f32 %v1306, %v1422
      %v1424 = vand.u32 %v924, 4294901760
      %v1425 = vsub.f32 %v924, %v1424
      %v1426 = vand.u32 %v1425, 4294901760
      %1427 = vmatmul.f32.gmra.mxu0 %v1426
      %v1428 = vpop.f32.mrf.mxu0
      %v1429 = vadd.f32 %v1311, %v1428
      %v1430 = vand.u32 %v927, 4294901760
      %v1431 = vsub.f32 %v927, %v1430
      %v1432 = vand.u32 %v1431, 4294901760
      %1433 = vmatmul.f32.gmra.mxu0 %v1432
      %v1434 = vpop.f32.mrf.mxu0
      %v1435 = vadd.f32 %v1316, %v1434
      %v1436 = vand.u32 %v930, 4294901760
      %v1437 = vsub.f32 %v930, %v1436
      %v1438 = vand.u32 %v1437, 4294901760
      %1439 = vmatmul.f32.gmra.mxu0 %v1438
      %v1440 = vpop.f32.mrf.mxu0
      %v1441 = vadd.f32 %v1321, %v1440
      %v1442 = vand.u32 %v933, 4294901760
      %v1443 = vsub.f32 %v933, %v1442
      %v1444 = vand.u32 %v1443, 4294901760
      %1445 = vmatmul.f32.gmra.mxu0 %v1444
      %v1446 = vpop.f32.mrf.mxu0
      %v1447 = vadd.f32 %v1326, %v1446
      %v1448 = vand.u32 %v936, 4294901760
      %v1449 = vsub.f32 %v936, %v1448
      %v1450 = vand.u32 %v1449, 4294901760
      %1451 = vmatmul.f32.gmra.mxu0 %v1450
      %v1452 = vpop.f32.mrf.mxu0
      %v1453 = vadd.f32 %v1331, %v1452
      %1454 = vdwg.mxu0
      %1455 = vmatpush.msra.mxu0 0.0
      %1456 = vmatpush.msra.mxu0 0.0
      %1457 = vmatpush.msra.mxu0 0.0
      %1458 = vmatpush.msra.mxu0 0.0
      %1459 = vmatpush.msra.mxu0 0.0
      %1460 = vmatpush.msra.mxu0 0.0
      %1461 = vmatpush.msra.mxu0 0.0
      %v1462 = vand.u32 %v888, 4294901760
      %v1463 = vsub.f32 %v888, %v1462
      %v1464 = vand.u32 %v1463, 4294901760
      %1465 = vmatpush.msra.mxu0 %v1464
      %v1466 = vand.u32 %v887, 4294901760
      %v1467 = vsub.f32 %v887, %v1466
      %v1468 = vand.u32 %v1467, 4294901760
      %1469 = vmatpush.msra.mxu0 %v1468
      %v1470 = vand.u32 %v886, 4294901760
      %v1471 = vsub.f32 %v886, %v1470
      %v1472 = vand.u32 %v1471, 4294901760
      %1473 = vmatpush.msra.mxu0 %v1472
      %v1474 = vand.u32 %v885, 4294901760
      %v1475 = vsub.f32 %v885, %v1474
      %v1476 = vand.u32 %v1475, 4294901760
      %1477 = vmatpush.msra.mxu0 %v1476
      %v1478 = vand.u32 %v884, 4294901760
      %v1479 = vsub.f32 %v884, %v1478
      %v1480 = vand.u32 %v1479, 4294901760
      %1481 = vmatpush.msra.mxu0 %v1480
      %v1482 = vand.u32 %v883, 4294901760
      %v1483 = vsub.f32 %v883, %v1482
      %v1484 = vand.u32 %v1483, 4294901760
      %1485 = vmatpush.msra.mxu0 %v1484
      %v1486 = vand.u32 %v882, 4294901760
      %v1487 = vsub.f32 %v882, %v1486
      %v1488 = vand.u32 %v1487, 4294901760
      %1489 = vmatpush.msra.mxu0 %v1488
      %v1490 = vand.u32 %v881, 4294901760
      %v1491 = vsub.f32 %v881, %v1490
      %v1492 = vand.u32 %v1491, 4294901760
      %1493 = vmatpush.msra.mxu0 %v1492
      %v1494 = vand.u32 %v880, 4294901760
      %v1495 = vsub.f32 %v880, %v1494
      %v1496 = vand.u32 %v1495, 4294901760
      %1497 = vmatpush.msra.mxu0 %v1496
      %v1498 = vand.u32 %v891, 4294901760
      %1499 = vmatmul.f32.gmra.mxu0 %v1498
      %v1500 = vpop.f32.mrf.mxu0
      %v1501 = vadd.f32 %v1363, %v1500
      %v1502 = vand.u32 %v894, 4294901760
      %1503 = vmatmul.f32.gmra.mxu0 %v1502
      %v1504 = vpop.f32.mrf.mxu0
      %v1505 = vadd.f32 %v1369, %v1504
      %v1506 = vand.u32 %v897, 4294901760
      %1507 = vmatmul.f32.gmra.mxu0 %v1506
      %v1508 = vpop.f32.mrf.mxu0
      %v1509 = vadd.f32 %v1375, %v1508
      %v1510 = vand.u32 %v900, 4294901760
      %1511 = vmatmul.f32.gmra.mxu0 %v1510
      %v1512 = vpop.f32.mrf.mxu0
      %v1513 = vadd.f32 %v1381, %v1512
      %v1514 = vand.u32 %v903, 4294901760
      %1515 = vmatmul.f32.gmra.mxu0 %v1514
      %v1516 = vpop.f32.mrf.mxu0
      %v1517 = vadd.f32 %v1387, %v1516
      %v1518 = vand.u32 %v906, 4294901760
      %1519 = vmatmul.f32.gmra.mxu0 %v1518
      %v1520 = vpop.f32.mrf.mxu0
      %v1521 = vadd.f32 %v1393, %v1520
      %v1522 = vand.u32 %v909, 4294901760
      %1523 = vmatmul.f32.gmra.mxu0 %v1522
      %v1524 = vpop.f32.mrf.mxu0
      %v1525 = vadd.f32 %v1399, %v1524
      %v1526 = vand.u32 %v912, 4294901760
      %1527 = vmatmul.f32.gmra.mxu0 %v1526
      %v1528 = vpop.f32.mrf.mxu0
      %v1529 = vadd.f32 %v1405, %v1528
      %v1530 = vand.u32 %v915, 4294901760
      %1531 = vmatmul.f32.gmra.mxu0 %v1530
      %v1532 = vpop.f32.mrf.mxu0
      %v1533 = vadd.f32 %v1411, %v1532
      %v1534 = vand.u32 %v918, 4294901760
      %1535 = vmatmul.f32.gmra.mxu0 %v1534
      %v1536 = vpop.f32.mrf.mxu0
      %v1537 = vadd.f32 %v1417, %v1536
      %v1538 = vand.u32 %v921, 4294901760
      %1539 = vmatmul.f32.gmra.mxu0 %v1538
      %v1540 = vpop.f32.mrf.mxu0
      %v1541 = vadd.f32 %v1423, %v1540
      %v1542 = vand.u32 %v924, 4294901760
      %1543 = vmatmul.f32.gmra.mxu0 %v1542
      %v1544 = vpop.f32.mrf.mxu0
      %v1545 = vadd.f32 %v1429, %v1544
      %v1546 = vand.u32 %v927, 4294901760
      %1547 = vmatmul.f32.gmra.mxu0 %v1546
      %v1548 = vpop.f32.mrf.mxu0
      %v1549 = vadd.f32 %v1435, %v1548
      %v1550 = vand.u32 %v930, 4294901760
      %1551 = vmatmul.f32.gmra.mxu0 %v1550
      %v1552 = vpop.f32.mrf.mxu0
      %v1553 = vadd.f32 %v1441, %v1552
      %v1554 = vand.u32 %v933, 4294901760
      %1555 = vmatmul.f32.gmra.mxu0 %v1554
      %v1556 = vpop.f32.mrf.mxu0
      %v1557 = vadd.f32 %v1447, %v1556
      %v1558 = vand.u32 %v936, 4294901760
      %1559 = vmatmul.f32.gmra.mxu0 %v1558
      %v1560 = vpop.f32.mrf.mxu0
      %v1561 = vadd.f32 %v1453, %v1560
      %1562 = vdwg.mxu0
      %1563 = vmatpush.msra.mxu0 0.0
      %1564 = vmatpush.msra.mxu0 0.0
      %1565 = vmatpush.msra.mxu0 0.0
      %1566 = vmatpush.msra.mxu0 0.0
      %1567 = vmatpush.msra.mxu0 0.0
      %1568 = vmatpush.msra.mxu0 0.0
      %1569 = vmatpush.msra.mxu0 0.0
      %v1570 = vand.u32 %v888, 4294901760
      %1571 = vmatpush.msra.mxu0 %v1570
      %v1572 = vand.u32 %v887, 4294901760
      %1573 = vmatpush.msra.mxu0 %v1572
      %v1574 = vand.u32 %v886, 4294901760
      %1575 = vmatpush.msra.mxu0 %v1574
      %v1576 = vand.u32 %v885, 4294901760
      %1577 = vmatpush.msra.mxu0 %v1576
      %v1578 = vand.u32 %v884, 4294901760
      %1579 = vmatpush.msra.mxu0 %v1578
      %v1580 = vand.u32 %v883, 4294901760
      %1581 = vmatpush.msra.mxu0 %v1580
      %v1582 = vand.u32 %v882, 4294901760
      %1583 = vmatpush.msra.mxu0 %v1582
      %v1584 = vand.u32 %v881, 4294901760
      %1585 = vmatpush.msra.mxu0 %v1584
      %v1586 = vand.u32 %v880, 4294901760
      %1587 = vmatpush.msra.mxu0 %v1586
      %v1588 = vand.u32 %v891, 4294901760
      %1589 = vmatmul.f32.gmra.mxu0 %v1588
      %v1590 = vpop.f32.mrf.mxu0
      %v1591 = vadd.f32 %v1501, %v1590
      %v1592 = vand.u32 %v894, 4294901760
      %1593 = vmatmul.f32.gmra.mxu0 %v1592
      %v1594 = vpop.f32.mrf.mxu0
      %v1595 = vadd.f32 %v1505, %v1594
      %v1596 = vand.u32 %v897, 4294901760
      %1597 = vmatmul.f32.gmra.mxu0 %v1596
      %v1598 = vpop.f32.mrf.mxu0
      %v1599 = vadd.f32 %v1509, %v1598
      %v1600 = vand.u32 %v900, 4294901760
      %1601 = vmatmul.f32.gmra.mxu0 %v1600
      %v1602 = vpop.f32.mrf.mxu0
      %v1603 = vadd.f32 %v1513, %v1602
      %v1604 = vand.u32 %v903, 4294901760
      %1605 = vmatmul.f32.gmra.mxu0 %v1604
      %v1606 = vpop.f32.mrf.mxu0
      %v1607 = vadd.f32 %v1517, %v1606
      %v1608 = vand.u32 %v906, 4294901760
      %1609 = vmatmul.f32.gmra.mxu0 %v1608
      %v1610 = vpop.f32.mrf.mxu0
      %v1611 = vadd.f32 %v1521, %v1610
      %v1612 = vand.u32 %v909, 4294901760
      %1613 = vmatmul.f32.gmra.mxu0 %v1612
      %v1614 = vpop.f32.mrf.mxu0
      %v1615 = vadd.f32 %v1525, %v1614
      %v1616 = vand.u32 %v912, 4294901760
      %1617 = vmatmul.f32.gmra.mxu0 %v1616
      %v1618 = vpop.f32.mrf.mxu0
      %v1619 = vadd.f32 %v1529, %v1618
      %v1620 = vand.u32 %v915, 4294901760
      %1621 = vmatmul.f32.gmra.mxu0 %v1620
      %v1622 = vpop.f32.mrf.mxu0
      %v1623 = vadd.f32 %v1533, %v1622
      %v1624 = vand.u32 %v918, 4294901760
      %1625 = vmatmul.f32.gmra.mxu0 %v1624
      %v1626 = vpop.f32.mrf.mxu0
      %v1627 = vadd.f32 %v1537, %v1626
      %v1628 = vand.u32 %v921, 4294901760
      %1629 = vmatmul.f32.gmra.mxu0 %v1628
      %v1630 = vpop.f32.mrf.mxu0
      %v1631 = vadd.f32 %v1541, %v1630
      %v1632 = vand.u32 %v924, 4294901760
      %1633 = vmatmul.f32.gmra.mxu0 %v1632
      %v1634 = vpop.f32.mrf.mxu0
      %v1635 = vadd.f32 %v1545, %v1634
      %v1636 = vand.u32 %v927, 4294901760
      %1637 = vmatmul.f32.gmra.mxu0 %v1636
      %v1638 = vpop.f32.mrf.mxu0
      %v1639 = vadd.f32 %v1549, %v1638
      %v1640 = vand.u32 %v930, 4294901760
      %1641 = vmatmul.f32.gmra.mxu0 %v1640
      %v1642 = vpop.f32.mrf.mxu0
      %v1643 = vadd.f32 %v1553, %v1642
      %v1644 = vand.u32 %v933, 4294901760
      %1645 = vmatmul.f32.gmra.mxu0 %v1644
      %v1646 = vpop.f32.mrf.mxu0
      %v1647 = vadd.f32 %v1557, %v1646
      %v1648 = vand.u32 %v936, 4294901760
      %1649 = vmatmul.f32.gmra.mxu0 %v1648
      %v1650 = vpop.f32.mrf.mxu0
      %v1651 = vadd.f32 %v1561, %v1650
      %1652 = vdwg.mxu0
      %v1653 = vld [vmem:[%s2] sm:$0x1]
      %v1655 = vperm.slane %v1653, 0
      %v1657 = vmul.f32 %v1591, %v1655
      %v1658 = vmul.f32 %v1595, %v1655
      %v1659 = vmul.f32 %v1599, %v1655
      %v1660 = vmul.f32 %v1603, %v1655
      %v1661 = vmul.f32 %v1607, %v1655
      %v1662 = vmul.f32 %v1611, %v1655
      %v1663 = vmul.f32 %v1615, %v1655
      %v1664 = vmul.f32 %v1619, %v1655
      %v1665 = vmul.f32 %v1623, %v1655
      %v1666 = vmul.f32 %v1627, %v1655
      %v1667 = vmul.f32 %v1631, %v1655
      %v1668 = vmul.f32 %v1635, %v1655
      %v1669 = vmul.f32 %v1639, %v1655
      %v1670 = vmul.f32 %v1643, %v1655
      %v1671 = vmul.f32 %v1647, %v1655
      %v1672 = vmul.f32 %v1651, %v1655
      %v1673 = vld [vmem:[%s3] sm:$0x1]
      %v1675 = vperm.slane %v1673, 0
      %v1677 = vadd.f32 %v1657, %v1675
      %v1678 = vadd.f32 %v1658, %v1675
      %v1679 = vadd.f32 %v1659, %v1675
      %v1680 = vadd.f32 %v1660, %v1675
      %v1681 = vadd.f32 %v1661, %v1675
      %v1682 = vadd.f32 %v1662, %v1675
      %v1683 = vadd.f32 %v1663, %v1675
      %v1684 = vadd.f32 %v1664, %v1675
      %v1685 = vadd.f32 %v1665, %v1675
      %v1686 = vadd.f32 %v1666, %v1675
      %v1687 = vadd.f32 %v1667, %v1675
      %v1688 = vadd.f32 %v1668, %v1675
      %v1689 = vadd.f32 %v1669, %v1675
      %v1690 = vadd.f32 %v1670, %v1675
      %v1691 = vadd.f32 %v1671, %v1675
      %v1692 = vadd.f32 %v1672, %v1675
      %vm1693 = vcmp.ge.f32.partialorder %v1677, 0.0
      %vm1694 = vcmp.ge.f32.partialorder %v1678, 0.0
      %vm1695 = vcmp.ge.f32.partialorder %v1679, 0.0
      %vm1696 = vcmp.ge.f32.partialorder %v1680, 0.0
      %vm1697 = vcmp.ge.f32.partialorder %v1681, 0.0
      %vm1698 = vcmp.ge.f32.partialorder %v1682, 0.0
      %vm1699 = vcmp.ge.f32.partialorder %v1683, 0.0
      %vm1700 = vcmp.ge.f32.partialorder %v1684, 0.0
      %vm1701 = vcmp.ge.f32.partialorder %v1685, 0.0
      %vm1702 = vcmp.ge.f32.partialorder %v1686, 0.0
      %vm1703 = vcmp.ge.f32.partialorder %v1687, 0.0
      %vm1704 = vcmp.ge.f32.partialorder %v1688, 0.0
      %vm1705 = vcmp.ge.f32.partialorder %v1689, 0.0
      %vm1706 = vcmp.ge.f32.partialorder %v1690, 0.0
      %vm1707 = vcmp.ge.f32.partialorder %v1691, 0.0
      %vm1708 = vcmp.ge.f32.partialorder %v1692, 0.0
      %v1709 = vmul.f32 %v1677, 0.25
      %v1710 = vmul.f32 %v1678, 0.25
      %v1711 = vmul.f32 %v1679, 0.25
      %v1712 = vmul.f32 %v1680, 0.25
      %v1713 = vmul.f32 %v1681, 0.25
      %v1714 = vmul.f32 %v1682, 0.25
      %v1715 = vmul.f32 %v1683, 0.25
      %v1716 = vmul.f32 %v1684, 0.25
      %v1717 = vmul.f32 %v1685, 0.25
      %v1718 = vmul.f32 %v1686, 0.25
      %v1719 = vmul.f32 %v1687, 0.25
      %v1720 = vmul.f32 %v1688, 0.25
      %v1721 = vmul.f32 %v1689, 0.25
      %v1722 = vmul.f32 %v1690, 0.25
      %v1723 = vmul.f32 %v1691, 0.25
      %v1724 = vmul.f32 %v1692, 0.25
      %v1725 = vsel %vm1693, %v1677, %v1709
      %v1726 = vsel %vm1694, %v1678, %v1710
      %v1727 = vsel %vm1695, %v1679, %v1711
      %v1728 = vsel %vm1696, %v1680, %v1712
      %v1729 = vsel %vm1697, %v1681, %v1713
      %v1730 = vsel %vm1698, %v1682, %v1714
      %v1731 = vsel %vm1699, %v1683, %v1715
      %v1732 = vsel %vm1700, %v1684, %v1716
      %v1733 = vsel %vm1701, %v1685, %v1717
      %v1734 = vsel %vm1702, %v1686, %v1718
      %v1735 = vsel %vm1703, %v1687, %v1719
      %v1736 = vsel %vm1704, %v1688, %v1720
      %v1737 = vsel %vm1705, %v1689, %v1721
      %v1738 = vsel %vm1706, %v1690, %v1722
      %v1739 = vsel %vm1707, %v1691, %v1723
      %v1740 = vsel %vm1708, %v1692, %v1724
      %vm1741 = vcmask 31744
      %1742 = vst.msk [vmem:[%s197] sm:$0xff] %vm1741, %v1725
      %1743 = vst.msk [vmem:[%s197 + $0x8] sm:$0xff] %vm1741, %v1726
      %1744 = vst.msk [vmem:[%s197 + $0x10] sm:$0xff] %vm1741, %v1727
      %1745 = vst.msk [vmem:[%s197 + $0x18] sm:$0xff] %vm1741, %v1728
      %1746 = vst.msk [vmem:[%s197 + $0x20] sm:$0xff] %vm1741, %v1729
      %1747 = vst.msk [vmem:[%s197 + $0x28] sm:$0xff] %vm1741, %v1730
      %1748 = vst.msk [vmem:[%s197 + $0x30] sm:$0xff] %vm1741, %v1731
      %1749 = vst.msk [vmem:[%s197 + $0x38] sm:$0xff] %vm1741, %v1732
      %1750 = vst.msk [vmem:[%s197 + $0x40] sm:$0xff] %vm1741, %v1733
      %1751 = vst.msk [vmem:[%s197 + $0x48] sm:$0xff] %vm1741, %v1734
      %1752 = vst.msk [vmem:[%s197 + $0x50] sm:$0xff] %vm1741, %v1735
      %1753 = vst.msk [vmem:[%s197 + $0x58] sm:$0xff] %vm1741, %v1736
      %1754 = vst.msk [vmem:[%s197 + $0x60] sm:$0xff] %vm1741, %v1737
      %1755 = vst.msk [vmem:[%s197 + $0x68] sm:$0xff] %vm1741, %v1738
      %1756 = vst.msk [vmem:[%s197 + $0x70] sm:$0xff] %vm1741, %v1739
      %1757 = vst.msk [vmem:[%s197 + $0x78] sm:$0xff] %vm1741, %v1740
      %p1758 = scmp.lt.s32.totalorder %s15, 3
      %s1759 = scalar_select %p1758, %s15, 3
      %s1760 = smul.addr %s1759, 16
      %s1761 = smul.addr %s1760, 8
      %s1762 = scalar_lea.vmem %s4, %s1761
      // Predicated region
      $region37: #{tpu_custom_call.1} parent=35 // pred_check
        %p1763 = pneg %p122
      $region38: #{tpu_custom_call.1} parent=35 // pred_check_branch
        %1765 = sbr.rel (%p1763) target = $region40
      $region39: #{tpu_custom_call.1} parent=35 // pred_region
        _
      $region40: #{tpu_custom_call.1} parent=35 // pred_fallthru
        _
    $region36: #{tpu_custom_call.1} parent=5 // pred_fallthru
      _
    %p1766 = scmp.le.s32.totalorder 2, %s10
    // Predicated region
    $region41: #{tpu_custom_call.1} parent=5 // pred_check
      %p1767 = pneg %p1766
    $region42: #{tpu_custom_call.1} parent=5 // pred_check_branch
      %1769 = sbr.rel (%p1767) target = $region44
    $region43: #{tpu_custom_call.1} parent=5 // pred_region
      %s1770 = ssub.s32 %s10, 2
      // Predicated region
      $region45: #{tpu_custom_call.1} parent=43 // pred_check
        %p1771 = pneg %p128
      $region46: #{tpu_custom_call.1} parent=43 // pred_check_branch
        %1773 = sbr.rel (%p1771) target = $region48
      $region47: #{tpu_custom_call.1} parent=43 // pred_region
        %p1774 = scmp.lt.s32.totalorder %s16, 3
        %s1775 = scalar_select %p1774, %s16, 3
        %s1776 = smul.addr %s1775, 16
        %s1777 = smul.addr %s1776, 8
        %s1778 = scalar_lea.vmem %s4, %s1777
      $region48: #{tpu_custom_call.1} parent=43 // pred_fallthru
        _
    $region44: #{tpu_custom_call.1} parent=5 // pred_fallthru
      _
  $region6: #{tpu_custom_call.1} parent=0 // loop_footer
    %s14 = sadd.s32 1, %s10
  $region7: #{tpu_custom_call.1} parent=0 // loop_footer_branch
    %9 = sbr.rel target = $region3
  $region8: #{tpu_custom_call.1} parent=0 // loop_exit
    _

</llo_original>
